<compile_context>
chip_gen: v6e
topology: v6e:2x2x1
jax: 0.10.0
libtpu: 0.0.40
codegen_flags: <defaults>
</compile_context>

<pallas_src>
import jax
import jax.numpy as jnp
from jax import lax
from jax.experimental import pallas as pl
from jax.experimental.pallas import tpu as pltpu


def _layer_norm(x, g, b, eps=1e-5):
    # var = E[x^2] - mu^2: one fewer full-width elementwise pass than
    # mean((x - mu)**2); all in f32.
    mu = jnp.mean(x, axis=-1, keepdims=True)
    var = jnp.mean(x * x, axis=-1, keepdims=True) - mu * mu
    return (x - mu) * lax.rsqrt(var + eps) * g + b


def make_period_encoder_kernel(num_heads):
    H = num_heads

    def kernel(lamb_ref, x_ref,
               ln1_g_ref, ln1_b_ref, wqkv_ref,
               norm_g_ref, norm_b_ref,
               ln2_g_ref, ln2_b_ref,
               w1_ref, b1_ref, w2_ref, b2_ref,
               o_ref):
        l = pl.program_id(1)                       # layer index (inner, "arbitrary")
        T, E = o_ref.shape
        hs = E // H
        scale = hs ** -0.5
        bf16 = jnp.bfloat16

        # Seed the resident f32 carry once per batch block; it stays in VMEM
        # across the whole layer axis because its block index never changes.
        @pl.when(l == 0)
        def _():
            o_ref[...] = x_ref[...]

        lamb = lamb_ref[l]                         # per-layer scalar from SMEM
        x = o_ref[...]                             # (T, E) f32 residual stream

        # ---------------- differential multi-head attention ----------------
        xn = _layer_norm(x, ln1_g_ref[...], ln1_b_ref[...])
        # one fused projection: (T,E) @ (E,5E) = [q1 | q2 | k1 | k2 | v]
        proj = jnp.dot(xn.astype(bf16), wqkv_ref[...],
                       preferred_element_type=jnp.float32)            # (T, 5E)

        # head-major stacking -> single batched matmuls for all heads and both
        # softmax branches (q1/q2 share one score matmul; reductions fused).
        pieces = [proj[:, i * hs:(i + 1) * hs] for i in range(5 * H)]
        q12 = (jnp.stack(pieces[:2 * H], 0) * scale).astype(bf16)     # (2H,T,hs)
        k12 = jnp.stack(pieces[2 * H:4 * H], 0).astype(bf16)          # (2H,T,hs)
        v = jnp.stack(pieces[4 * H:], 0).astype(bf16)                 # (H, T,hs)

        s = jnp.einsum('gtd,gsd->gts', q12, k12,
                       preferred_element_type=jnp.float32)            # (2H,T,T)
        m = jnp.max(s, axis=-1, keepdims=True)
        e = jnp.exp(s - m)
        sm = e * pl.reciprocal(jnp.sum(e, axis=-1, keepdims=True), approx=True)
        wei = sm[:H] - lamb * sm[H:]                                   # (H,T,T)
        out_h = jnp.einsum('hts,hsd->htd', wei.astype(bf16), v,
                           preferred_element_type=jnp.float32)         # (H,T,hs)

        # lane-dense (T, E) attention output, computed as a value (no scratch,
        # no per-head masked stores) and fed straight into the LayerNorm.
        att = jnp.concatenate([out_h[h] for h in range(H)], axis=-1)   # (T, E)
        att = _layer_norm(att, norm_g_ref[...], norm_b_ref[...])
        # NOTE: reference MultiHeadDifferentialAttention defines self.proj but
        # never applies it in forward() -> intentionally omitted.
        x = x + (1.0 - lamb) * att                                     # residual 1

        # ------------------------------ FFN ---------------------------------
        xn2 = _layer_norm(x, ln2_g_ref[...], ln2_b_ref[...])
        hid = jnp.dot(xn2.astype(bf16), w1_ref[...],
                      preferred_element_type=jnp.float32) + b1_ref[...]
        hid = jnp.maximum(hid, 0.0)
        ffn = jnp.dot(hid.astype(bf16), w2_ref[...],
                      preferred_element_type=jnp.float32) + b2_ref[...]

        o_ref[...] = (x + ffn).astype(o_ref.dtype)                     # residual 2

    return kernel


def _vmem_limit_bytes(T, E, H):
    weights = 2 * (13 * E * E) * 2                 # double-buffered bf16 wqkv+w1+w2
    params = 2 * 8 * 8 * max(E, 128) * 4           # padded (1, .) param rows, db
    blocks = 2 * 2 * T * E * 4                     # x + resident carry blocks (f32)
    temps = (16 * T * E + 12 * H * T * T) * 4      # proj/ffn/score/softmax temporaries
    est = 2 * (weights + params + blocks + temps)  # 2x headroom
    return int(min(max(est, 32 << 20), 64 << 20))  # stay under v7x's 64 MiB


def period_encoder(x, stacked, num_heads):
    B, T, E = x.shape
    assert E % num_heads == 0
    assert T % 8 == 0, "pad T to a multiple of 8 (ideally 128) before calling"
    depth = stacked["lamb"].shape[0]
    orig_dtype = x.dtype
    # Keep the residual carry in f32 regardless of caller dtype.
    x2 = x.reshape(B * T, E).astype(jnp.float32)

    def wspec(r, c):
        # per-layer weight block, leading layer dim squeezed out of the ref
        return pl.BlockSpec((None, r, c), lambda b, l: (l, 0, 0))

    out = pl.pallas_call(
        make_period_encoder_kernel(num_heads),
        out_shape=jax.ShapeDtypeStruct((B * T, E), jnp.float32),
        grid=(B, depth),
        in_specs=[
            pl.BlockSpec(memory_space=pltpu.MemorySpace.SMEM),       # lamb (depth,)
            pl.BlockSpec((T, E), lambda b, l: (b, 0)),               # x (seed, per batch)
            wspec(1, E), wspec(1, E),                                # ln1 g/b
            wspec(E, 5 * E),                                         # packed wqkv (bf16)
            wspec(1, E), wspec(1, E),                                # att-out norm g/b
            wspec(1, E), wspec(1, E),                                # ln2 g/b
            wspec(E, 4 * E), wspec(1, 4 * E),                        # w1 (bf16), b1
            wspec(4 * E, E), wspec(1, E),                            # w2 (bf16), b2
        ],
        out_specs=pl.BlockSpec((T, E), lambda b, l: (b, 0)),         # resident carry
        input_output_aliases={1: 0},                                 # reuse x's HBM buffer
        compiler_params=pltpu.CompilerParams(
            dimension_semantics=("parallel", "arbitrary"),
            vmem_limit_bytes=_vmem_limit_bytes(T, E, num_heads)),
    )(stacked["lamb"], x2,
      stacked["ln1_g"], stacked["ln1_b"], stacked["wqkv"],
      stacked["norm_g"], stacked["norm_b"],
      stacked["ln2_g"], stacked["ln2_b"],
      stacked["w1"], stacked["b1"], stacked["w2"], stacked["b2"])
    return out.reshape(B, T, E).astype(orig_dtype)


# ------------------------- parameter init (deterministic) -------------------
def init_block_params(key, E):
    ks = jax.random.split(key, 9)

    def w(k, fi, fo):
        return jax.random.normal(k, (fi, fo), jnp.float32) * (fi ** -0.5)

    return dict(
        lamb=jnp.array([[0.8]], jnp.float32),                       # lambda_init
        ln1_g=jnp.ones((1, E), jnp.float32), ln1_b=jnp.zeros((1, E), jnp.float32),
        wq1=w(ks[0], E, E), wk1=w(ks[1], E, E),
        wq2=w(ks[2], E, E), wk2=w(ks[3], E, E),
        wv=w(ks[4], E, E),
        norm_g=jnp.ones((1, E), jnp.float32), norm_b=jnp.zeros((1, E), jnp.float32),
        ln2_g=jnp.ones((1, E), jnp.float32), ln2_b=jnp.zeros((1, E), jnp.float32),
        w1=w(ks[5], E, 4 * E),
        b1=jax.random.normal(ks[6], (1, 4 * E), jnp.float32) * 0.01,
        w2=w(ks[7], 4 * E, E),
        b2=jax.random.normal(ks[8], (1, E), jnp.float32) * 0.01,
    )


def stack_params(params):
    """Stack per-layer params on a leading layer axis; pack [q1|q2|k1|k2|v];
    large matmul weights are stored in bf16 (biases / LN params stay f32)."""
    st = lambda name: jnp.stack([p[name] for p in params], axis=0)
    wqkv = jnp.stack(
        [jnp.concatenate([p["wq1"], p["wq2"], p["wk1"], p["wk2"], p["wv"]],
                         axis=1) for p in params], axis=0)           # (L, E, 5E)
    return dict(
        lamb=jnp.stack([p["lamb"][0, 0] for p in params]),           # (L,)
        ln1_g=st("ln1_g"), ln1_b=st("ln1_b"),
        wqkv=wqkv.astype(jnp.bfloat16),
        norm_g=st("norm_g"), norm_b=st("norm_b"),
        ln2_g=st("ln2_g"), ln2_b=st("ln2_b"),
        w1=st("w1").astype(jnp.bfloat16), b1=st("b1"),
        w2=st("w2").astype(jnp.bfloat16), b2=st("b2"),
    )


# ------------------------- pure-JAX reference for validation ----------------
def block_ref(x, p, num_heads):
    """Mirrors the kernel's mixed precision: bf16 matmul inputs, f32 accum,
    f32 LayerNorm/softmax (exact division)."""
    E = x.shape[-1]
    hs = E // num_heads
    lamb = p["lamb"][0, 0]
    bf = jnp.bfloat16

    def ln(v, g, b):
        mu = v.mean(-1, keepdims=True)
        var = (v * v).mean(-1, keepdims=True) - mu * mu
        return (v - mu) * lax.rsqrt(var + 1e-5) * g + b

    def mm(a, w):
        return jnp.dot(a.astype(bf), w.astype(bf),
                       preferred_element_type=jnp.float32)

    xn = ln(x, p["ln1_g"], p["ln1_b"])
    q1 = mm(xn, p["wq1"]); q2 = mm(xn, p["wq2"])
    k1 = mm(xn, p["wk1"]); k2 = mm(xn, p["wk2"])
    v = mm(xn, p["wv"])
    scale = hs ** -0.5
    outs = []
    for h in range(num_heads):
        sl = slice(h * hs, (h + 1) * hs)
        s1 = jnp.einsum('btd,bsd->bts', (q1[..., sl] * scale).astype(bf),
                        k1[..., sl].astype(bf), preferred_element_type=jnp.float32)
        s2 = jnp.einsum('btd,bsd->bts', (q2[..., sl] * scale).astype(bf),
                        k2[..., sl].astype(bf), preferred_element_type=jnp.float32)
        w = jax.nn.softmax(s1, -1) - lamb * jax.nn.softmax(s2, -1)
        outs.append(jnp.einsum('bts,bsd->btd', w.astype(bf), v[..., sl].astype(bf),
                               preferred_element_type=jnp.float32))
    att = jnp.concatenate(outs, -1)
    att = (1.0 - lamb) * ln(att, p["norm_g"], p["norm_b"])
    x = x + att
    xn2 = ln(x, p["ln2_g"], p["ln2_b"])
    hid = jnp.maximum(mm(xn2, p["w1"]) + p["b1"], 0.0)
    ff = mm(hid, p["w2"]) + p["b2"]
    return x + ff


if __name__ == "__main__":
    embedding_dim, num_heads, depth = 32, 4, 2
    B, T = 2, 8

    key = jax.random.PRNGKey(0)
    kx, kp = jax.random.split(key)
    x = jax.random.normal(kx, (B, T, embedding_dim), jnp.float32)
    params = [init_block_params(k, embedding_dim)
              for k in jax.random.split(kp, depth)]
    stacked = stack_params(params)

    out = period_encoder(x, stacked, num_heads)
    out = jax.block_until_ready(out)

    ref = x
    for p in params:
        ref = block_ref(ref, p, num_heads)

    assert out.shape == (B, T, embedding_dim)
    max_err = float(jnp.max(jnp.abs(out - ref)))
    # kernel differs from the reference only by the EUP approx reciprocal in
    # softmax and accumulation grouping; weights/activations are bf16 in both.
    assert jnp.allclose(out, ref, rtol=1e-2, atol=1e-2), f"max_err={max_err}"
    print("KERNEL_OK")
</pallas_src>

<mosaic_0001>
module attributes {stable_mosaic.version = 11 : i64} {
  func.func @kernel(%arg0: i32, %arg1: i32, %arg2: memref<2xf32, #tpu.memory_space<smem>>, %arg3: memref<8x32xf32, #tpu.memory_space<vmem>>, %arg4: memref<1x1x32xf32, #tpu.memory_space<vmem>>, %arg5: memref<1x1x32xf32, #tpu.memory_space<vmem>>, %arg6: memref<1x32x160xbf16, #tpu.memory_space<vmem>>, %arg7: memref<1x1x32xf32, #tpu.memory_space<vmem>>, %arg8: memref<1x1x32xf32, #tpu.memory_space<vmem>>, %arg9: memref<1x1x32xf32, #tpu.memory_space<vmem>>, %arg10: memref<1x1x32xf32, #tpu.memory_space<vmem>>, %arg11: memref<1x32x128xbf16, #tpu.memory_space<vmem>>, %arg12: memref<1x1x128xf32, #tpu.memory_space<vmem>>, %arg13: memref<1x128x32xbf16, #tpu.memory_space<vmem>>, %arg14: memref<1x1x32xf32, #tpu.memory_space<vmem>>, %arg15: memref<8x32xf32, #tpu.memory_space<vmem>>) attributes {dimension_semantics = [#tpu.dimension_semantics<parallel>, #tpu.dimension_semantics<arbitrary>], iteration_bounds = array<i64: 2, 2>, scalar_prefetch = 0 : i64, scratch_operands = 0 : i64, tpu.core_type = #tpu.core_type<tc>, window_params = [{transform_indices = @transform_0, window_bounds = array<i64: 2>}, {transform_indices = @transform_1, window_bounds = array<i64: 8, 32>}, {transform_indices = @transform_2, window_bounds = array<i64: 1, 1, 32>}, {transform_indices = @transform_3, window_bounds = array<i64: 1, 1, 32>}, {transform_indices = @transform_4, window_bounds = array<i64: 1, 32, 160>}, {transform_indices = @transform_5, window_bounds = array<i64: 1, 1, 32>}, {transform_indices = @transform_6, window_bounds = array<i64: 1, 1, 32>}, {transform_indices = @transform_7, window_bounds = array<i64: 1, 1, 32>}, {transform_indices = @transform_8, window_bounds = array<i64: 1, 1, 32>}, {transform_indices = @transform_9, window_bounds = array<i64: 1, 32, 128>}, {transform_indices = @transform_10, window_bounds = array<i64: 1, 1, 128>}, {transform_indices = @transform_11, window_bounds = array<i64: 1, 128, 32>}, {transform_indices = @transform_12, window_bounds = array<i64: 1, 1, 32>}, {transform_indices = @transform_13, window_bounds = array<i64: 8, 32>}]} {
    %c0_i32 = arith.constant 0 : i32
    %0 = arith.cmpi eq, %arg1, %c0_i32 : i32
    %1 = arith.extui %0 : i1 to i32
    %c0_i32_0 = arith.constant 0 : i32
    %2 = arith.cmpi ne, %1, %c0_i32_0 : i32
    scf.if %2 {
      %c0_61 = arith.constant 0 : index
      %c0_62 = arith.constant 0 : index
      %187 = vector.load %arg3[%c0_61, %c0_62] : memref<8x32xf32, #tpu.memory_space<vmem>>, vector<8x32xf32>
      %c0_63 = arith.constant 0 : index
      %c0_64 = arith.constant 0 : index
      %188 = vector.load %arg15[%c0_63, %c0_64] : memref<8x32xf32, #tpu.memory_space<vmem>>, vector<8x32xf32>
      tpu.vector_store %arg15[%c0_63, %c0_64], %187 {strides = array<i32>} : memref<8x32xf32, #tpu.memory_space<vmem>>, vector<8x32xf32>,
    } else {
    }
    %3 = arith.index_cast %arg1 : i32 to index
    %4 = memref.load %arg2[%3] : memref<2xf32, #tpu.memory_space<smem>>
    %c0 = arith.constant 0 : index
    %c0_1 = arith.constant 0 : index
    %5 = vector.load %arg15[%c0, %c0_1] : memref<8x32xf32, #tpu.memory_space<vmem>>, vector<8x32xf32>
    %c0_2 = arith.constant 0 : index
    %c0_3 = arith.constant 0 : index
    %c0_4 = arith.constant 0 : index
    %6 = vector.load %arg4[%c0_2, %c0_3, %c0_4] : memref<1x1x32xf32, #tpu.memory_space<vmem>>, vector<1x1x32xf32>
    %7 = vector.shape_cast %6 : vector<1x1x32xf32> to vector<1x32xf32>
    %c0_5 = arith.constant 0 : index
    %c0_6 = arith.constant 0 : index
    %c0_7 = arith.constant 0 : index
    %8 = vector.load %arg5[%c0_5, %c0_6, %c0_7] : memref<1x1x32xf32, #tpu.memory_space<vmem>>, vector<1x1x32xf32>
    %9 = vector.shape_cast %8 : vector<1x1x32xf32> to vector<1x32xf32>
    %cst = arith.constant dense<0.000000e+00> : vector<8xf32>
    %10 = vector.multi_reduction <add>, %5, %cst [1] : vector<8x32xf32> to vector<8xf32>
    %11 = vector.shape_cast %10 : vector<8xf32> to vector<8x1xf32>
    %cst_8 = arith.constant 3.200000e+01 : f32
    %12 = vector.broadcast %cst_8 : f32 to vector<8x1xf32>
    %13 = arith.divf %11, %12 : vector<8x1xf32>
    %14 = arith.mulf %5, %5 : vector<8x32xf32>
    %cst_9 = arith.constant dense<0.000000e+00> : vector<8xf32>
    %15 = vector.multi_reduction <add>, %14, %cst_9 [1] : vector<8x32xf32> to vector<8xf32>
    %16 = vector.shape_cast %15 : vector<8xf32> to vector<8x1xf32>
    %cst_10 = arith.constant 3.200000e+01 : f32
    %17 = vector.broadcast %cst_10 : f32 to vector<8x1xf32>
    %18 = arith.divf %16, %17 : vector<8x1xf32>
    %19 = arith.mulf %13, %13 : vector<8x1xf32>
    %20 = arith.subf %18, %19 : vector<8x1xf32>
    %21 = vector.broadcast %13 : vector<8x1xf32> to vector<8x32xf32>
    %22 = arith.subf %5, %21 : vector<8x32xf32>
    %cst_11 = arith.constant 9.99999974E-6 : f32
    %23 = vector.broadcast %cst_11 : f32 to vector<8x1xf32>
    %24 = arith.addf %20, %23 : vector<8x1xf32>
    %25 = math.rsqrt %24 : vector<8x1xf32>
    %26 = vector.broadcast %25 : vector<8x1xf32> to vector<8x32xf32>
    %27 = arith.mulf %22, %26 : vector<8x32xf32>
    %28 = vector.broadcast %7 : vector<1x32xf32> to vector<8x32xf32>
    %29 = arith.mulf %27, %28 : vector<8x32xf32>
    %30 = vector.broadcast %9 : vector<1x32xf32> to vector<8x32xf32>
    %31 = arith.addf %29, %30 : vector<8x32xf32>
    %32 = arith.truncf %31 : vector<8x32xf32> to vector<8x32xbf16>
    %c0_12 = arith.constant 0 : index
    %c0_13 = arith.constant 0 : index
    %c0_14 = arith.constant 0 : index
    %33 = vector.load %arg6[%c0_12, %c0_13, %c0_14] : memref<1x32x160xbf16, #tpu.memory_space<vmem>>, vector<1x32x160xbf16>
    %34 = vector.shape_cast %33 : vector<1x32x160xbf16> to vector<32x160xbf16>
    %cst_15 = arith.constant dense<0.000000e+00> : vector<8x160xf32>
    %35 = tpu.matmul %32, %34, %cst_15 {dimension_numbers = #tpu.dot_dimension_numbers<[1], [0], [0], [1], [0, 0, 1, 1], [], []>} : vector<8x32xbf16>, vector<32x160xbf16>, vector<8x160xf32> -> vector<8x160xf32>
    %36 = vector.extract_strided_slice %35 {offsets = [0, 0], sizes = [8, 8], strides = [1, 1]} : vector<8x160xf32> to vector<8x8xf32>
    %37 = vector.extract_strided_slice %35 {offsets = [0, 8], sizes = [8, 8], strides = [1, 1]} : vector<8x160xf32> to vector<8x8xf32>
    %38 = vector.extract_strided_slice %35 {offsets = [0, 16], sizes = [8, 8], strides = [1, 1]} : vector<8x160xf32> to vector<8x8xf32>
    %39 = vector.extract_strided_slice %35 {offsets = [0, 24], sizes = [8, 8], strides = [1, 1]} : vector<8x160xf32> to vector<8x8xf32>
    %40 = vector.extract_strided_slice %35 {offsets = [0, 32], sizes = [8, 8], strides = [1, 1]} : vector<8x160xf32> to vector<8x8xf32>
    %41 = vector.extract_strided_slice %35 {offsets = [0, 40], sizes = [8, 8], strides = [1, 1]} : vector<8x160xf32> to vector<8x8xf32>
    %42 = vector.extract_strided_slice %35 {offsets = [0, 48], sizes = [8, 8], strides = [1, 1]} : vector<8x160xf32> to vector<8x8xf32>
    %43 = vector.extract_strided_slice %35 {offsets = [0, 56], sizes = [8, 8], strides = [1, 1]} : vector<8x160xf32> to vector<8x8xf32>
    %44 = vector.extract_strided_slice %35 {offsets = [0, 64], sizes = [8, 8], strides = [1, 1]} : vector<8x160xf32> to vector<8x8xf32>
    %45 = vector.extract_strided_slice %35 {offsets = [0, 72], sizes = [8, 8], strides = [1, 1]} : vector<8x160xf32> to vector<8x8xf32>
    %46 = vector.extract_strided_slice %35 {offsets = [0, 80], sizes = [8, 8], strides = [1, 1]} : vector<8x160xf32> to vector<8x8xf32>
    %47 = vector.extract_strided_slice %35 {offsets = [0, 88], sizes = [8, 8], strides = [1, 1]} : vector<8x160xf32> to vector<8x8xf32>
    %48 = vector.extract_strided_slice %35 {offsets = [0, 96], sizes = [8, 8], strides = [1, 1]} : vector<8x160xf32> to vector<8x8xf32>
    %49 = vector.extract_strided_slice %35 {offsets = [0, 104], sizes = [8, 8], strides = [1, 1]} : vector<8x160xf32> to vector<8x8xf32>
    %50 = vector.extract_strided_slice %35 {offsets = [0, 112], sizes = [8, 8], strides = [1, 1]} : vector<8x160xf32> to vector<8x8xf32>
    %51 = vector.extract_strided_slice %35 {offsets = [0, 120], sizes = [8, 8], strides = [1, 1]} : vector<8x160xf32> to vector<8x8xf32>
    %52 = vector.extract_strided_slice %35 {offsets = [0, 128], sizes = [8, 8], strides = [1, 1]} : vector<8x160xf32> to vector<8x8xf32>
    %53 = vector.extract_strided_slice %35 {offsets = [0, 136], sizes = [8, 8], strides = [1, 1]} : vector<8x160xf32> to vector<8x8xf32>
    %54 = vector.extract_strided_slice %35 {offsets = [0, 144], sizes = [8, 8], strides = [1, 1]} : vector<8x160xf32> to vector<8x8xf32>
    %55 = vector.extract_strided_slice %35 {offsets = [0, 152], sizes = [8, 8], strides = [1, 1]} : vector<8x160xf32> to vector<8x8xf32>
    %56 = vector.shape_cast %36 : vector<8x8xf32> to vector<1x8x8xf32>
    %57 = vector.shape_cast %37 : vector<8x8xf32> to vector<1x8x8xf32>
    %58 = vector.shape_cast %38 : vector<8x8xf32> to vector<1x8x8xf32>
    %59 = vector.shape_cast %39 : vector<8x8xf32> to vector<1x8x8xf32>
    %60 = vector.shape_cast %40 : vector<8x8xf32> to vector<1x8x8xf32>
    %61 = vector.shape_cast %41 : vector<8x8xf32> to vector<1x8x8xf32>
    %62 = vector.shape_cast %42 : vector<8x8xf32> to vector<1x8x8xf32>
    %63 = vector.shape_cast %43 : vector<8x8xf32> to vector<1x8x8xf32>
    %64 = tpu.concatenate %56, %57, %58, %59, %60, %61, %62, %63 in 0 : vector<1x8x8xf32>, vector<1x8x8xf32>, vector<1x8x8xf32>, vector<1x8x8xf32>, vector<1x8x8xf32>, vector<1x8x8xf32>, vector<1x8x8xf32>, vector<1x8x8xf32> -> vector<8x8x8xf32>
    %cst_16 = arith.constant 0.353553385 : f32
    %65 = vector.broadcast %cst_16 : f32 to vector<8x8x8xf32>
    %66 = arith.mulf %64, %65 : vector<8x8x8xf32>
    %67 = arith.truncf %66 : vector<8x8x8xf32> to vector<8x8x8xbf16>
    %68 = vector.shape_cast %44 : vector<8x8xf32> to vector<1x8x8xf32>
    %69 = vector.shape_cast %45 : vector<8x8xf32> to vector<1x8x8xf32>
    %70 = vector.shape_cast %46 : vector<8x8xf32> to vector<1x8x8xf32>
    %71 = vector.shape_cast %47 : vector<8x8xf32> to vector<1x8x8xf32>
    %72 = vector.shape_cast %48 : vector<8x8xf32> to vector<1x8x8xf32>
    %73 = vector.shape_cast %49 : vector<8x8xf32> to vector<1x8x8xf32>
    %74 = vector.shape_cast %50 : vector<8x8xf32> to vector<1x8x8xf32>
    %75 = vector.shape_cast %51 : vector<8x8xf32> to vector<1x8x8xf32>
    %76 = tpu.concatenate %68, %69, %70, %71, %72, %73, %74, %75 in 0 : vector<1x8x8xf32>, vector<1x8x8xf32>, vector<1x8x8xf32>, vector<1x8x8xf32>, vector<1x8x8xf32>, vector<1x8x8xf32>, vector<1x8x8xf32>, vector<1x8x8xf32> -> vector<8x8x8xf32>
    %77 = arith.truncf %76 : vector<8x8x8xf32> to vector<8x8x8xbf16>
    %78 = vector.shape_cast %52 : vector<8x8xf32> to vector<1x8x8xf32>
    %79 = vector.shape_cast %53 : vector<8x8xf32> to vector<1x8x8xf32>
    %80 = vector.shape_cast %54 : vector<8x8xf32> to vector<1x8x8xf32>
    %81 = vector.shape_cast %55 : vector<8x8xf32> to vector<1x8x8xf32>
    %82 = tpu.concatenate %78, %79, %80, %81 in 0 : vector<1x8x8xf32>, vector<1x8x8xf32>, vector<1x8x8xf32>, vector<1x8x8xf32> -> vector<4x8x8xf32>
    %83 = arith.truncf %82 : vector<4x8x8xf32> to vector<4x8x8xbf16>
    "tpu.trace_start"() <{level = 10 : i32, message = "gtd,gsd->gts"}> : () -> ()
    %cst_17 = arith.constant dense<0.000000e+00> : vector<8x8x8xf32>
    %84 = tpu.matmul %67, %77, %cst_17 {dimension_numbers = #tpu.dot_dimension_numbers<[2], [2], [1], [1], [0, 0, 0, 1, 1, 1], [0], [0]>} : vector<8x8x8xbf16>, vector<8x8x8xbf16>, vector<8x8x8xf32> -> vector<8x8x8xf32>
    "tpu.trace_stop"() : () -> ()
    %cst_18 = arith.constant dense<0xFF800000> : vector<8x8xf32>
    %85 = vector.multi_reduction <maximumf>, %84, %cst_18 [2] : vector<8x8x8xf32> to vector<8x8xf32>
    %86 = vector.shape_cast %85 : vector<8x8xf32> to vector<8x8x1xf32>
    %87 = vector.broadcast %86 : vector<8x8x1xf32> to vector<8x8x8xf32>
    %88 = arith.subf %84, %87 : vector<8x8x8xf32>
    %89 = math.exp %88 : vector<8x8x8xf32>
    %cst_19 = arith.constant dense<0.000000e+00> : vector<8x8xf32>
    %90 = vector.multi_reduction <add>, %89, %cst_19 [2] : vector<8x8x8xf32> to vector<8x8xf32>
    %91 = vector.shape_cast %90 : vector<8x8xf32> to vector<8x8x1xf32>
    %92 = tpu.reciprocal %91 {approx = true} : vector<8x8x1xf32> -> vector<8x8x1xf32>
    %93 = vector.broadcast %92 : vector<8x8x1xf32> to vector<8x8x8xf32>
    %94 = arith.mulf %89, %93 : vector<8x8x8xf32>
    %95 = vector.extract_strided_slice %94 {offsets = [0, 0, 0], sizes = [4, 8, 8], strides = [1, 1, 1]} : vector<8x8x8xf32> to vector<4x8x8xf32>
    %96 = vector.extract_strided_slice %94 {offsets = [4, 0, 0], sizes = [4, 8, 8], strides = [1, 1, 1]} : vector<8x8x8xf32> to vector<4x8x8xf32>
    %97 = vector.broadcast %4 : f32 to vector<4x8x8xf32>
    %98 = arith.mulf %97, %96 : vector<4x8x8xf32>
    %99 = arith.subf %95, %98 : vector<4x8x8xf32>
    %100 = arith.truncf %99 : vector<4x8x8xf32> to vector<4x8x8xbf16>
    "tpu.trace_start"() <{level = 10 : i32, message = "hts,hsd->htd"}> : () -> ()
    %cst_20 = arith.constant dense<0.000000e+00> : vector<4x8x8xf32>
    %101 = tpu.matmul %100, %83, %cst_20 {dimension_numbers = #tpu.dot_dimension_numbers<[2], [1], [1], [2], [0, 0, 0, 1, 1, 2], [0], [0]>} : vector<4x8x8xbf16>, vector<4x8x8xbf16>, vector<4x8x8xf32> -> vector<4x8x8xf32>
    "tpu.trace_stop"() : () -> ()
    %102 = vector.extract_strided_slice %101 {offsets = [0, 0, 0], sizes = [1, 8, 8], strides = [1, 1, 1]} : vector<4x8x8xf32> to vector<1x8x8xf32>
    %103 = vector.shape_cast %102 : vector<1x8x8xf32> to vector<8x8xf32>
    %104 = vector.extract_strided_slice %101 {offsets = [1, 0, 0], sizes = [1, 8, 8], strides = [1, 1, 1]} : vector<4x8x8xf32> to vector<1x8x8xf32>
    %105 = vector.shape_cast %104 : vector<1x8x8xf32> to vector<8x8xf32>
    %106 = vector.extract_strided_slice %101 {offsets = [2, 0, 0], sizes = [1, 8, 8], strides = [1, 1, 1]} : vector<4x8x8xf32> to vector<1x8x8xf32>
    %107 = vector.shape_cast %106 : vector<1x8x8xf32> to vector<8x8xf32>
    %108 = vector.extract_strided_slice %101 {offsets = [3, 0, 0], sizes = [1, 8, 8], strides = [1, 1, 1]} : vector<4x8x8xf32> to vector<1x8x8xf32>
    %109 = vector.shape_cast %108 : vector<1x8x8xf32> to vector<8x8xf32>
    %110 = tpu.concatenate %103, %105, %107, %109 in 1 : vector<8x8xf32>, vector<8x8xf32>, vector<8x8xf32>, vector<8x8xf32> -> vector<8x32xf32>
    %c0_21 = arith.constant 0 : index
    %c0_22 = arith.constant 0 : index
    %c0_23 = arith.constant 0 : index
    %111 = vector.load %arg7[%c0_21, %c0_22, %c0_23] : memref<1x1x32xf32, #tpu.memory_space<vmem>>, vector<1x1x32xf32>
    %112 = vector.shape_cast %111 : vector<1x1x32xf32> to vector<1x32xf32>
    %c0_24 = arith.constant 0 : index
    %c0_25 = arith.constant 0 : index
    %c0_26 = arith.constant 0 : index
    %113 = vector.load %arg8[%c0_24, %c0_25, %c0_26] : memref<1x1x32xf32, #tpu.memory_space<vmem>>, vector<1x1x32xf32>
    %114 = vector.shape_cast %113 : vector<1x1x32xf32> to vector<1x32xf32>
    %cst_27 = arith.constant dense<0.000000e+00> : vector<8xf32>
    %115 = vector.multi_reduction <add>, %110, %cst_27 [1] : vector<8x32xf32> to vector<8xf32>
    %116 = vector.shape_cast %115 : vector<8xf32> to vector<8x1xf32>
    %cst_28 = arith.constant 3.200000e+01 : f32
    %117 = vector.broadcast %cst_28 : f32 to vector<8x1xf32>
    %118 = arith.divf %116, %117 : vector<8x1xf32>
    %119 = arith.mulf %110, %110 : vector<8x32xf32>
    %cst_29 = arith.constant dense<0.000000e+00> : vector<8xf32>
    %120 = vector.multi_reduction <add>, %119, %cst_29 [1] : vector<8x32xf32> to vector<8xf32>
    %121 = vector.shape_cast %120 : vector<8xf32> to vector<8x1xf32>
    %cst_30 = arith.constant 3.200000e+01 : f32
    %122 = vector.broadcast %cst_30 : f32 to vector<8x1xf32>
    %123 = arith.divf %121, %122 : vector<8x1xf32>
    %124 = arith.mulf %118, %118 : vector<8x1xf32>
    %125 = arith.subf %123, %124 : vector<8x1xf32>
    %126 = vector.broadcast %118 : vector<8x1xf32> to vector<8x32xf32>
    %127 = arith.subf %110, %126 : vector<8x32xf32>
    %cst_31 = arith.constant 9.99999974E-6 : f32
    %128 = vector.broadcast %cst_31 : f32 to vector<8x1xf32>
    %129 = arith.addf %125, %128 : vector<8x1xf32>
    %130 = math.rsqrt %129 : vector<8x1xf32>
    %131 = vector.broadcast %130 : vector<8x1xf32> to vector<8x32xf32>
    %132 = arith.mulf %127, %131 : vector<8x32xf32>
    %133 = vector.broadcast %112 : vector<1x32xf32> to vector<8x32xf32>
    %134 = arith.mulf %132, %133 : vector<8x32xf32>
    %135 = vector.broadcast %114 : vector<1x32xf32> to vector<8x32xf32>
    %136 = arith.addf %134, %135 : vector<8x32xf32>
    %cst_32 = arith.constant 1.000000e+00 : f32
    %137 = arith.subf %cst_32, %4 : f32
    %138 = vector.broadcast %137 : f32 to vector<8x32xf32>
    %139 = arith.mulf %138, %136 : vector<8x32xf32>
    %140 = arith.addf %5, %139 : vector<8x32xf32>
    %c0_33 = arith.constant 0 : index
    %c0_34 = arith.constant 0 : index
    %c0_35 = arith.constant 0 : index
    %141 = vector.load %arg9[%c0_33, %c0_34, %c0_35] : memref<1x1x32xf32, #tpu.memory_space<vmem>>, vector<1x1x32xf32>
    %142 = vector.shape_cast %141 : vector<1x1x32xf32> to vector<1x32xf32>
    %c0_36 = arith.constant 0 : index
    %c0_37 = arith.constant 0 : index
    %c0_38 = arith.constant 0 : index
    %143 = vector.load %arg10[%c0_36, %c0_37, %c0_38] : memref<1x1x32xf32, #tpu.memory_space<vmem>>, vector<1x1x32xf32>
    %144 = vector.shape_cast %143 : vector<1x1x32xf32> to vector<1x32xf32>
    %cst_39 = arith.constant dense<0.000000e+00> : vector<8xf32>
    %145 = vector.multi_reduction <add>, %140, %cst_39 [1] : vector<8x32xf32> to vector<8xf32>
    %146 = vector.shape_cast %145 : vector<8xf32> to vector<8x1xf32>
    %cst_40 = arith.constant 3.200000e+01 : f32
    %147 = vector.broadcast %cst_40 : f32 to vector<8x1xf32>
    %148 = arith.divf %146, %147 : vector<8x1xf32>
    %149 = arith.mulf %140, %140 : vector<8x32xf32>
    %cst_41 = arith.constant dense<0.000000e+00> : vector<8xf32>
    %150 = vector.multi_reduction <add>, %149, %cst_41 [1] : vector<8x32xf32> to vector<8xf32>
    %151 = vector.shape_cast %150 : vector<8xf32> to vector<8x1xf32>
    %cst_42 = arith.constant 3.200000e+01 : f32
    %152 = vector.broadcast %cst_42 : f32 to vector<8x1xf32>
    %153 = arith.divf %151, %152 : vector<8x1xf32>
    %154 = arith.mulf %148, %148 : vector<8x1xf32>
    %155 = arith.subf %153, %154 : vector<8x1xf32>
    %156 = vector.broadcast %148 : vector<8x1xf32> to vector<8x32xf32>
    %157 = arith.subf %140, %156 : vector<8x32xf32>
    %cst_43 = arith.constant 9.99999974E-6 : f32
    %158 = vector.broadcast %cst_43 : f32 to vector<8x1xf32>
    %159 = arith.addf %155, %158 : vector<8x1xf32>
    %160 = math.rsqrt %159 : vector<8x1xf32>
    %161 = vector.broadcast %160 : vector<8x1xf32> to vector<8x32xf32>
    %162 = arith.mulf %157, %161 : vector<8x32xf32>
    %163 = vector.broadcast %142 : vector<1x32xf32> to vector<8x32xf32>
    %164 = arith.mulf %162, %163 : vector<8x32xf32>
    %165 = vector.broadcast %144 : vector<1x32xf32> to vector<8x32xf32>
    %166 = arith.addf %164, %165 : vector<8x32xf32>
    %167 = arith.truncf %166 : vector<8x32xf32> to vector<8x32xbf16>
    %c0_44 = arith.constant 0 : index
    %c0_45 = arith.constant 0 : index
    %c0_46 = arith.constant 0 : index
    %168 = vector.load %arg11[%c0_44, %c0_45, %c0_46] : memref<1x32x128xbf16, #tpu.memory_space<vmem>>, vector<1x32x128xbf16>
    %169 = vector.shape_cast %168 : vector<1x32x128xbf16> to vector<32x128xbf16>
    %cst_47 = arith.constant dense<0.000000e+00> : vector<8x128xf32>
    %170 = tpu.matmul %167, %169, %cst_47 {dimension_numbers = #tpu.dot_dimension_numbers<[1], [0], [0], [1], [0, 0, 1, 1], [], []>} : vector<8x32xbf16>, vector<32x128xbf16>, vector<8x128xf32> -> vector<8x128xf32>
    %c0_48 = arith.constant 0 : index
    %c0_49 = arith.constant 0 : index
    %c0_50 = arith.constant 0 : index
    %171 = vector.load %arg12[%c0_48, %c0_49, %c0_50] : memref<1x1x128xf32, #tpu.memory_space<vmem>>, vector<1x1x128xf32>
    %172 = vector.shape_cast %171 : vector<1x1x128xf32> to vector<1x128xf32>
    %173 = vector.broadcast %172 : vector<1x128xf32> to vector<8x128xf32>
    %174 = arith.addf %170, %173 : vector<8x128xf32>
    %cst_51 = arith.constant 0.000000e+00 : f32
    %175 = vector.broadcast %cst_51 : f32 to vector<8x128xf32>
    %176 = arith.maximumf %174, %175 : vector<8x128xf32>
    %177 = arith.truncf %176 : vector<8x128xf32> to vector<8x128xbf16>
    %c0_52 = arith.constant 0 : index
    %c0_53 = arith.constant 0 : index
    %c0_54 = arith.constant 0 : index
    %178 = vector.load %arg13[%c0_52, %c0_53, %c0_54] : memref<1x128x32xbf16, #tpu.memory_space<vmem>>, vector<1x128x32xbf16>
    %179 = vector.shape_cast %178 : vector<1x128x32xbf16> to vector<128x32xbf16>
    %cst_55 = arith.constant dense<0.000000e+00> : vector<8x32xf32>
    %180 = tpu.matmul %177, %179, %cst_55 {dimension_numbers = #tpu.dot_dimension_numbers<[1], [0], [0], [1], [0, 0, 1, 1], [], []>} : vector<8x128xbf16>, vector<128x32xbf16>, vector<8x32xf32> -> vector<8x32xf32>
    %c0_56 = arith.constant 0 : index
    %c0_57 = arith.constant 0 : index
    %c0_58 = arith.constant 0 : index
    %181 = vector.load %arg14[%c0_56, %c0_57, %c0_58] : memref<1x1x32xf32, #tpu.memory_space<vmem>>, vector<1x1x32xf32>
    %182 = vector.shape_cast %181 : vector<1x1x32xf32> to vector<1x32xf32>
    %183 = vector.broadcast %182 : vector<1x32xf32> to vector<8x32xf32>
    %184 = arith.addf %180, %183 : vector<8x32xf32>
    %185 = arith.addf %140, %184 : vector<8x32xf32>
    %c0_59 = arith.constant 0 : index
    %c0_60 = arith.constant 0 : index
    %186 = vector.load %arg15[%c0_59, %c0_60] : memref<8x32xf32, #tpu.memory_space<vmem>>, vector<8x32xf32>
    tpu.vector_store %arg15[%c0_59, %c0_60], %185 {strides = array<i32>} : memref<8x32xf32, #tpu.memory_space<vmem>>, vector<8x32xf32>,
    return
  }
  func.func @transform_0(%arg0: i32, %arg1: i32) -> i32 {
    %c0_i32 = arith.constant 0 : i32
    %c0_i32_0 = arith.constant 0 : i32
    return %c0_i32 : i32
  }
  func.func @transform_1(%arg0: i32, %arg1: i32) -> (i32, i32) {
    %c0_i32 = arith.constant 0 : i32
    %c0_i32_0 = arith.constant 0 : i32
    return %arg0, %c0_i32 : i32, i32
  }
  func.func @transform_2(%arg0: i32, %arg1: i32) -> (i32, i32, i32) {
    %c0_i32 = arith.constant 0 : i32
    %c0_i32_0 = arith.constant 0 : i32
    %c0_i32_1 = arith.constant 0 : i32
    return %arg1, %c0_i32, %c0_i32_0 : i32, i32, i32
  }
  func.func @transform_3(%arg0: i32, %arg1: i32) -> (i32, i32, i32) {
    %c0_i32 = arith.constant 0 : i32
    %c0_i32_0 = arith.constant 0 : i32
    %c0_i32_1 = arith.constant 0 : i32
    return %arg1, %c0_i32, %c0_i32_0 : i32, i32, i32
  }
  func.func @transform_4(%arg0: i32, %arg1: i32) -> (i32, i32, i32) {
    %c0_i32 = arith.constant 0 : i32
    %c0_i32_0 = arith.constant 0 : i32
    %c0_i32_1 = arith.constant 0 : i32
    return %arg1, %c0_i32, %c0_i32_0 : i32, i32, i32
  }
  func.func @transform_5(%arg0: i32, %arg1: i32) -> (i32, i32, i32) {
    %c0_i32 = arith.constant 0 : i32
    %c0_i32_0 = arith.constant 0 : i32
    %c0_i32_1 = arith.constant 0 : i32
    return %arg1, %c0_i32, %c0_i32_0 : i32, i32, i32
  }
  func.func @transform_6(%arg0: i32, %arg1: i32) -> (i32, i32, i32) {
    %c0_i32 = arith.constant 0 : i32
    %c0_i32_0 = arith.constant 0 : i32
    %c0_i32_1 = arith.constant 0 : i32
    return %arg1, %c0_i32, %c0_i32_0 : i32, i32, i32
  }
  func.func @transform_7(%arg0: i32, %arg1: i32) -> (i32, i32, i32) {
    %c0_i32 = arith.constant 0 : i32
    %c0_i32_0 = arith.constant 0 : i32
    %c0_i32_1 = arith.constant 0 : i32
    return %arg1, %c0_i32, %c0_i32_0 : i32, i32, i32
  }
  func.func @transform_8(%arg0: i32, %arg1: i32) -> (i32, i32, i32) {
    %c0_i32 = arith.constant 0 : i32
    %c0_i32_0 = arith.constant 0 : i32
    %c0_i32_1 = arith.constant 0 : i32
    return %arg1, %c0_i32, %c0_i32_0 : i32, i32, i32
  }
  func.func @transform_9(%arg0: i32, %arg1: i32) -> (i32, i32, i32) {
    %c0_i32 = arith.constant 0 : i32
    %c0_i32_0 = arith.constant 0 : i32
    %c0_i32_1 = arith.constant 0 : i32
    return %arg1, %c0_i32, %c0_i32_0 : i32, i32, i32
  }
  func.func @transform_10(%arg0: i32, %arg1: i32) -> (i32, i32, i32) {
    %c0_i32 = arith.constant 0 : i32
    %c0_i32_0 = arith.constant 0 : i32
    %c0_i32_1 = arith.constant 0 : i32
    return %arg1, %c0_i32, %c0_i32_0 : i32, i32, i32
  }
  func.func @transform_11(%arg0: i32, %arg1: i32) -> (i32, i32, i32) {
    %c0_i32 = arith.constant 0 : i32
    %c0_i32_0 = arith.constant 0 : i32
    %c0_i32_1 = arith.constant 0 : i32
    return %arg1, %c0_i32, %c0_i32_0 : i32, i32, i32
  }
  func.func @transform_12(%arg0: i32, %arg1: i32) -> (i32, i32, i32) {
    %c0_i32 = arith.constant 0 : i32
    %c0_i32_0 = arith.constant 0 : i32
    %c0_i32_1 = arith.constant 0 : i32
    return %arg1, %c0_i32, %c0_i32_0 : i32, i32, i32
  }
  func.func @transform_13(%arg0: i32, %arg1: i32) -> (i32, i32) {
    %c0_i32 = arith.constant 0 : i32
    %c0_i32_0 = arith.constant 0 : i32
    return %arg0, %c0_i32 : i32, i32
  }
}

</mosaic_0001>

<llo_original>
// kernel: tpu_custom_call.1
$region0: #{tpu_custom_call.1}
  #allocation0 [shape = 'u32[]', space=smem, size = 0x4, offset = 0x4, fixed_abs, tag = 'smem constant byte address 0x4 - core index']
  #allocation1 [shape = 'u32[144,128]{1,0:T(1,128)}', space=vmem, size = 0x12000, scoped, tag = 'internal scratch']
  %s0 = inlined_call_operand.vmem [shape: f32[2], index: 0, kind: input, shape index: {}]
  %s1 = inlined_call_operand.hbm [shape: f32[16,32], index: 1, kind: input, shape index: {}, may-alias: {1,13}]
  %s2 = inlined_call_operand.vmem [shape: f32[2,1,32], index: 2, kind: input, shape index: {}]
  %s3 = inlined_call_operand.vmem [shape: f32[2,1,32], index: 3, kind: input, shape index: {}]
  %s4 = inlined_call_operand.vmem [shape: bf16[2,32,160], index: 4, kind: input, shape index: {}]
  %s5 = inlined_call_operand.vmem [shape: f32[2,1,32], index: 5, kind: input, shape index: {}]
  %s6 = inlined_call_operand.vmem [shape: f32[2,1,32], index: 6, kind: input, shape index: {}]
  %s7 = inlined_call_operand.vmem [shape: f32[2,1,32], index: 7, kind: input, shape index: {}]
  %s8 = inlined_call_operand.vmem [shape: f32[2,1,32], index: 8, kind: input, shape index: {}]
  %s9 = inlined_call_operand.vmem [shape: bf16[2,32,128], index: 9, kind: input, shape index: {}]
  %s10 = inlined_call_operand.vmem [shape: f32[2,1,128], index: 10, kind: input, shape index: {}]
  %s11 = inlined_call_operand.vmem [shape: bf16[2,128,32], index: 11, kind: input, shape index: {}]
  %s12 = inlined_call_operand.vmem [shape: f32[2,1,32], index: 12, kind: input, shape index: {}]
  %s13 = inlined_call_operand.hbm [shape: f32[16,32], index: 13, kind: output, shape index: {}, may-alias: {1,13}]
  %s14 = sld [smem:[#allocation0]]
  $region97: #{tpu_custom_call.1} parent=0
    _
  %s16 = ssub.s32 1, %s14
  %s17 = scalar_select 0, %s16, %s14
  $region1: #{tpu_custom_call.1} parent=0
    #allocation2 [shape = 'u8[512]{0}', space=smem, size = 0x200, scoped, tag = 'input window, operand 0, single buffered']
    #allocation3 [shape = 's32[2]{0}', space=sflag, size = 0x8, scoped, tag = 'scoped memory for tpu_custom_call.1']
    #allocation4 [shape = 's32[2]{0}', space=sflag, size = 0x8, scoped, tag = 'scoped memory for tpu_custom_call.1']
    #allocation5 [shape = 's32[2]{0}', space=sflag, size = 0x8, scoped, tag = 'scoped memory for tpu_custom_call.1']
    #allocation6 [shape = 'u8[8192]{0}', space=vmem, size = 0x2000, scoped, tag = 'input window, operand 1']
    #allocation7 [shape = 'u8[8192]{0}', space=vmem, size = 0x2000, scoped, tag = 'output window, operand 0']
    %18 = vsyncpa [#allocation5], 0
    %19 = vsyncpa [#allocation3], 0
    %s20 = scalar_lea.sflag [#allocation3], 1
    %21 = vsyncpa %s20, 0
    %22 = vsyncpa [#allocation4], 0
    %s23 = scalar_lea.sflag [#allocation4], 1
    %24 = vsyncpa %s23, 0
    loop: start=0, step=1, limit=6
    $region2: #{tpu_custom_call.1} parent=1 // loop_pre_header
      _
    $region3: #{tpu_custom_call.1} parent=1 // loop_header
      %s26 = sphi 0, %s30
      %p27 = scmp.ge.s32.totalorder %s26, 6
      %s33 = sphi 0, %s45
      %s34 = sphi 0, %s41
      %s35 = sphi 0, %s33
      %s36 = sphi 0, %s34
      %s37 = sphi 0, %s35
      %s38 = sphi 0, %s36
      %s46 = sphi 0, %s46
      %s48 = sphi 0, %s46
      %s49 = sphi 0, %s48
      %s63 = sphi 0, %s49
      %s69 = sphi 0, %s71
      %s72 = sphi 0, %s69
      %s73 = sphi 0, %s72
      %s89 = sphi 0, %s73
      %s95 = sphi 0, %s97
      %s98 = sphi 0, %s95
      %s99 = sphi 0, %s98
      %s115 = sphi 0, %s99
      %s121 = sphi 0, %s123
      %s124 = sphi 0, %s121
      %s125 = sphi 0, %s124
      %s141 = sphi 0, %s125
      %s147 = sphi 0, %s149
      %s150 = sphi 0, %s147
      %s151 = sphi 0, %s150
      %s167 = sphi 0, %s151
      %s173 = sphi 0, %s175
      %s176 = sphi 0, %s173
      %s177 = sphi 0, %s176
      %s193 = sphi 0, %s177
      %s199 = sphi 0, %s201
      %s202 = sphi 0, %s199
      %s203 = sphi 0, %s202
      %s219 = sphi 0, %s203
      %s225 = sphi 0, %s227
      %s228 = sphi 0, %s225
      %s229 = sphi 0, %s228
      %s245 = sphi 0, %s229
      %s251 = sphi 0, %s253
      %s254 = sphi 0, %s251
      %s255 = sphi 0, %s254
      %s271 = sphi 0, %s255
      %s277 = sphi 0, %s279
      %s280 = sphi 0, %s277
      %s281 = sphi 0, %s280
      %s297 = sphi 0, %s281
      %s303 = sphi 0, %s305
      %s306 = sphi 0, %s303
      %s307 = sphi 0, %s306
      %s323 = sphi 0, %s307
      %s329 = sphi 0, %s331
      %s332 = sphi 0, %s329
      %s333 = sphi 0, %s332
      %s349 = sphi 0, %s333
      %s355 = sphi 0, %s357
      %s358 = sphi 0, %s355
      %s359 = sphi 0, %s358
      %s375 = sphi 0, %s359
      %s381 = sphi 0, %s383
      %s384 = sphi 0, %s381
      %s385 = sphi 0, %s384
      %s401 = sphi 0, %s385
    $region4: #{tpu_custom_call.1} parent=1 // loop_header_branch
      %29 = sbr.rel (%p27) target = $region8
    $region5: #{tpu_custom_call.1} parent=1 // loop_body
      %s31 = ssub.s32 %s26, 1
      %s32 = ssub.s32 %s26, 2
      %s39 = sadd.s32 1, %s34
      %p40 = scmp.ge.s32.totalorder %s39, 2
      %s41 = scalar_select %p40, 0, %s39
      %s42 = sadd.s32 1, %s33
      %s43 = scalar_select %p40, %s42, %s33
      %p44 = scmp.ge.s32.totalorder %s43, 2
      %s45 = scalar_select %p44, 0, %s43
      %s47 = sadd.s32 %s46, 1
      %p50 = scmp.eq.s32.totalorder %s26, 3
      %p51 = scmp.ne.s32.totalorder %s46, %s48
      %p52 = scmp.eq.s32.totalorder %s26, 0
      %p53 = por %p51, %p52
      %p54 = scmp.ne.s32.totalorder %s46, %s48
      %p55 = scmp.eq.s32.totalorder %s31, 3
      %p56 = por %p54, %p55
      %p57 = scmp.ne.s32.totalorder %s48, %s49
      %p58 = scmp.eq.s32.totalorder %s31, 0
      %p59 = por %p57, %p58
      %p60 = scmp.ne.s32.totalorder %s48, %s49
      %p61 = scmp.eq.s32.totalorder %s32, 3
      %p62 = por %p60, %p61
      %p64 = scmp.ne.s32.totalorder %s49, %s63
      %p65 = scmp.eq.s32.totalorder %s32, 0
      %p66 = por %p64, %p65
      %s67 = ssub.s32 %s33, %s45
      %p68 = scmp.eq.s32.totalorder %s67, 0
      %s70 = sadd.s32 %s69, 1
      %s71 = scalar_select %p68, %s69, %s70
      %p74 = pneg %p68
      %p75 = scmp.eq.s32.totalorder %s26, 3
      %p76 = por %p74, %p75
      %p77 = scmp.ne.s32.totalorder %s69, %s72
      %p78 = scmp.eq.s32.totalorder %s26, 0
      %p79 = por %p77, %p78
      %p80 = scmp.ne.s32.totalorder %s69, %s72
      %p81 = scmp.eq.s32.totalorder %s31, 3
      %p82 = por %p80, %p81
      %p83 = scmp.ne.s32.totalorder %s72, %s73
      %p84 = scmp.eq.s32.totalorder %s31, 0
      %p85 = por %p83, %p84
      %p86 = scmp.ne.s32.totalorder %s72, %s73
      %p87 = scmp.eq.s32.totalorder %s32, 3
      %p88 = por %p86, %p87
      %p90 = scmp.ne.s32.totalorder %s73, %s89
      %p91 = scmp.eq.s32.totalorder %s32, 0
      %p92 = por %p90, %p91
      %s93 = ssub.s32 %s34, %s41
      %p94 = scmp.eq.s32.totalorder %s93, 0
      %s96 = sadd.s32 %s95, 1
      %s97 = scalar_select %p94, %s95, %s96
      %p100 = pneg %p94
      %p101 = scmp.eq.s32.totalorder %s26, 3
      %p102 = por %p100, %p101
      %p103 = scmp.ne.s32.totalorder %s95, %s98
      %p104 = scmp.eq.s32.totalorder %s26, 0
      %p105 = por %p103, %p104
      %p106 = scmp.ne.s32.totalorder %s95, %s98
      %p107 = scmp.eq.s32.totalorder %s31, 3
      %p108 = por %p106, %p107
      %p109 = scmp.ne.s32.totalorder %s98, %s99
      %p110 = scmp.eq.s32.totalorder %s31, 0
      %p111 = por %p109, %p110
      %p112 = scmp.ne.s32.totalorder %s98, %s99
      %p113 = scmp.eq.s32.totalorder %s32, 3
      %p114 = por %p112, %p113
      %p116 = scmp.ne.s32.totalorder %s99, %s115
      %p117 = scmp.eq.s32.totalorder %s32, 0
      %p118 = por %p116, %p117
      %s119 = ssub.s32 %s34, %s41
      %p120 = scmp.eq.s32.totalorder %s119, 0
      %s122 = sadd.s32 %s121, 1
      %s123 = scalar_select %p120, %s121, %s122
      %p126 = pneg %p120
      %p127 = scmp.eq.s32.totalorder %s26, 3
      %p128 = por %p126, %p127
      %p129 = scmp.ne.s32.totalorder %s121, %s124
      %p130 = scmp.eq.s32.totalorder %s26, 0
      %p131 = por %p129, %p130
      %p132 = scmp.ne.s32.totalorder %s121, %s124
      %p133 = scmp.eq.s32.totalorder %s31, 3
      %p134 = por %p132, %p133
      %p135 = scmp.ne.s32.totalorder %s124, %s125
      %p136 = scmp.eq.s32.totalorder %s31, 0
      %p137 = por %p135, %p136
      %p138 = scmp.ne.s32.totalorder %s124, %s125
      %p139 = scmp.eq.s32.totalorder %s32, 3
      %p140 = por %p138, %p139
      %p142 = scmp.ne.s32.totalorder %s125, %s141
      %p143 = scmp.eq.s32.totalorder %s32, 0
      %p144 = por %p142, %p143
      %s145 = ssub.s32 %s34, %s41
      %p146 = scmp.eq.s32.totalorder %s145, 0
      %s148 = sadd.s32 %s147, 1
      %s149 = scalar_select %p146, %s147, %s148
      %p152 = pneg %p146
      %p153 = scmp.eq.s32.totalorder %s26, 3
      %p154 = por %p152, %p153
      %p155 = scmp.ne.s32.totalorder %s147, %s150
      %p156 = scmp.eq.s32.totalorder %s26, 0
      %p157 = por %p155, %p156
      %p158 = scmp.ne.s32.totalorder %s147, %s150
      %p159 = scmp.eq.s32.totalorder %s31, 3
      %p160 = por %p158, %p159
      %p161 = scmp.ne.s32.totalorder %s150, %s151
      %p162 = scmp.eq.s32.totalorder %s31, 0
      %p163 = por %p161, %p162
      %p164 = scmp.ne.s32.totalorder %s150, %s151
      %p165 = scmp.eq.s32.totalorder %s32, 3
      %p166 = por %p164, %p165
      %p168 = scmp.ne.s32.totalorder %s151, %s167
      %p169 = scmp.eq.s32.totalorder %s32, 0
      %p170 = por %p168, %p169
      %s171 = ssub.s32 %s34, %s41
      %p172 = scmp.eq.s32.totalorder %s171, 0
      %s174 = sadd.s32 %s173, 1
      %s175 = scalar_select %p172, %s173, %s174
      %p178 = pneg %p172
      %p179 = scmp.eq.s32.totalorder %s26, 3
      %p180 = por %p178, %p179
      %p181 = scmp.ne.s32.totalorder %s173, %s176
      %p182 = scmp.eq.s32.totalorder %s26, 0
      %p183 = por %p181, %p182
      %p184 = scmp.ne.s32.totalorder %s173, %s176
      %p185 = scmp.eq.s32.totalorder %s31, 3
      %p186 = por %p184, %p185
      %p187 = scmp.ne.s32.totalorder %s176, %s177
      %p188 = scmp.eq.s32.totalorder %s31, 0
      %p189 = por %p187, %p188
      %p190 = scmp.ne.s32.totalorder %s176, %s177
      %p191 = scmp.eq.s32.totalorder %s32, 3
      %p192 = por %p190, %p191
      %p194 = scmp.ne.s32.totalorder %s177, %s193
      %p195 = scmp.eq.s32.totalorder %s32, 0
      %p196 = por %p194, %p195
      %s197 = ssub.s32 %s34, %s41
      %p198 = scmp.eq.s32.totalorder %s197, 0
      %s200 = sadd.s32 %s199, 1
      %s201 = scalar_select %p198, %s199, %s200
      %p204 = pneg %p198
      %p205 = scmp.eq.s32.totalorder %s26, 3
      %p206 = por %p204, %p205
      %p207 = scmp.ne.s32.totalorder %s199, %s202
      %p208 = scmp.eq.s32.totalorder %s26, 0
      %p209 = por %p207, %p208
      %p210 = scmp.ne.s32.totalorder %s199, %s202
      %p211 = scmp.eq.s32.totalorder %s31, 3
      %p212 = por %p210, %p211
      %p213 = scmp.ne.s32.totalorder %s202, %s203
      %p214 = scmp.eq.s32.totalorder %s31, 0
      %p215 = por %p213, %p214
      %p216 = scmp.ne.s32.totalorder %s202, %s203
      %p217 = scmp.eq.s32.totalorder %s32, 3
      %p218 = por %p216, %p217
      %p220 = scmp.ne.s32.totalorder %s203, %s219
      %p221 = scmp.eq.s32.totalorder %s32, 0
      %p222 = por %p220, %p221
      %s223 = ssub.s32 %s34, %s41
      %p224 = scmp.eq.s32.totalorder %s223, 0
      %s226 = sadd.s32 %s225, 1
      %s227 = scalar_select %p224, %s225, %s226
      %p230 = pneg %p224
      %p231 = scmp.eq.s32.totalorder %s26, 3
      %p232 = por %p230, %p231
      %p233 = scmp.ne.s32.totalorder %s225, %s228
      %p234 = scmp.eq.s32.totalorder %s26, 0
      %p235 = por %p233, %p234
      %p236 = scmp.ne.s32.totalorder %s225, %s228
      %p237 = scmp.eq.s32.totalorder %s31, 3
      %p238 = por %p236, %p237
      %p239 = scmp.ne.s32.totalorder %s228, %s229
      %p240 = scmp.eq.s32.totalorder %s31, 0
      %p241 = por %p239, %p240
      %p242 = scmp.ne.s32.totalorder %s228, %s229
      %p243 = scmp.eq.s32.totalorder %s32, 3
      %p244 = por %p242, %p243
      %p246 = scmp.ne.s32.totalorder %s229, %s245
      %p247 = scmp.eq.s32.totalorder %s32, 0
      %p248 = por %p246, %p247
      %s249 = ssub.s32 %s34, %s41
      %p250 = scmp.eq.s32.totalorder %s249, 0
      %s252 = sadd.s32 %s251, 1
      %s253 = scalar_select %p250, %s251, %s252
      %p256 = pneg %p250
      %p257 = scmp.eq.s32.totalorder %s26, 3
      %p258 = por %p256, %p257
      %p259 = scmp.ne.s32.totalorder %s251, %s254
      %p260 = scmp.eq.s32.totalorder %s26, 0
      %p261 = por %p259, %p260
      %p262 = scmp.ne.s32.totalorder %s251, %s254
      %p263 = scmp.eq.s32.totalorder %s31, 3
      %p264 = por %p262, %p263
      %p265 = scmp.ne.s32.totalorder %s254, %s255
      %p266 = scmp.eq.s32.totalorder %s31, 0
      %p267 = por %p265, %p266
      %p268 = scmp.ne.s32.totalorder %s254, %s255
      %p269 = scmp.eq.s32.totalorder %s32, 3
      %p270 = por %p268, %p269
      %p272 = scmp.ne.s32.totalorder %s255, %s271
      %p273 = scmp.eq.s32.totalorder %s32, 0
      %p274 = por %p272, %p273
      %s275 = ssub.s32 %s34, %s41
      %p276 = scmp.eq.s32.totalorder %s275, 0
      %s278 = sadd.s32 %s277, 1
      %s279 = scalar_select %p276, %s277, %s278
      %p282 = pneg %p276
      %p283 = scmp.eq.s32.totalorder %s26, 3
      %p284 = por %p282, %p283
      %p285 = scmp.ne.s32.totalorder %s277, %s280
      %p286 = scmp.eq.s32.totalorder %s26, 0
      %p287 = por %p285, %p286
      %p288 = scmp.ne.s32.totalorder %s277, %s280
      %p289 = scmp.eq.s32.totalorder %s31, 3
      %p290 = por %p288, %p289
      %p291 = scmp.ne.s32.totalorder %s280, %s281
      %p292 = scmp.eq.s32.totalorder %s31, 0
      %p293 = por %p291, %p292
      %p294 = scmp.ne.s32.totalorder %s280, %s281
      %p295 = scmp.eq.s32.totalorder %s32, 3
      %p296 = por %p294, %p295
      %p298 = scmp.ne.s32.totalorder %s281, %s297
      %p299 = scmp.eq.s32.totalorder %s32, 0
      %p300 = por %p298, %p299
      %s301 = ssub.s32 %s34, %s41
      %p302 = scmp.eq.s32.totalorder %s301, 0
      %s304 = sadd.s32 %s303, 1
      %s305 = scalar_select %p302, %s303, %s304
      %p308 = pneg %p302
      %p309 = scmp.eq.s32.totalorder %s26, 3
      %p310 = por %p308, %p309
      %p311 = scmp.ne.s32.totalorder %s303, %s306
      %p312 = scmp.eq.s32.totalorder %s26, 0
      %p313 = por %p311, %p312
      %p314 = scmp.ne.s32.totalorder %s303, %s306
      %p315 = scmp.eq.s32.totalorder %s31, 3
      %p316 = por %p314, %p315
      %p317 = scmp.ne.s32.totalorder %s306, %s307
      %p318 = scmp.eq.s32.totalorder %s31, 0
      %p319 = por %p317, %p318
      %p320 = scmp.ne.s32.totalorder %s306, %s307
      %p321 = scmp.eq.s32.totalorder %s32, 3
      %p322 = por %p320, %p321
      %p324 = scmp.ne.s32.totalorder %s307, %s323
      %p325 = scmp.eq.s32.totalorder %s32, 0
      %p326 = por %p324, %p325
      %s327 = ssub.s32 %s34, %s41
      %p328 = scmp.eq.s32.totalorder %s327, 0
      %s330 = sadd.s32 %s329, 1
      %s331 = scalar_select %p328, %s329, %s330
      %p334 = pneg %p328
      %p335 = scmp.eq.s32.totalorder %s26, 3
      %p336 = por %p334, %p335
      %p337 = scmp.ne.s32.totalorder %s329, %s332
      %p338 = scmp.eq.s32.totalorder %s26, 0
      %p339 = por %p337, %p338
      %p340 = scmp.ne.s32.totalorder %s329, %s332
      %p341 = scmp.eq.s32.totalorder %s31, 3
      %p342 = por %p340, %p341
      %p343 = scmp.ne.s32.totalorder %s332, %s333
      %p344 = scmp.eq.s32.totalorder %s31, 0
      %p345 = por %p343, %p344
      %p346 = scmp.ne.s32.totalorder %s332, %s333
      %p347 = scmp.eq.s32.totalorder %s32, 3
      %p348 = por %p346, %p347
      %p350 = scmp.ne.s32.totalorder %s333, %s349
      %p351 = scmp.eq.s32.totalorder %s32, 0
      %p352 = por %p350, %p351
      %s353 = ssub.s32 %s34, %s41
      %p354 = scmp.eq.s32.totalorder %s353, 0
      %s356 = sadd.s32 %s355, 1
      %s357 = scalar_select %p354, %s355, %s356
      %p360 = pneg %p354
      %p361 = scmp.eq.s32.totalorder %s26, 3
      %p362 = por %p360, %p361
      %p363 = scmp.ne.s32.totalorder %s355, %s358
      %p364 = scmp.eq.s32.totalorder %s26, 0
      %p365 = por %p363, %p364
      %p366 = scmp.ne.s32.totalorder %s355, %s358
      %p367 = scmp.eq.s32.totalorder %s31, 3
      %p368 = por %p366, %p367
      %p369 = scmp.ne.s32.totalorder %s358, %s359
      %p370 = scmp.eq.s32.totalorder %s31, 0
      %p371 = por %p369, %p370
      %p372 = scmp.ne.s32.totalorder %s358, %s359
      %p373 = scmp.eq.s32.totalorder %s32, 3
      %p374 = por %p372, %p373
      %p376 = scmp.ne.s32.totalorder %s359, %s375
      %p377 = scmp.eq.s32.totalorder %s32, 0
      %p378 = por %p376, %p377
      %s379 = ssub.s32 %s33, %s45
      %p380 = scmp.eq.s32.totalorder %s379, 0
      %s382 = sadd.s32 %s381, 1
      %s383 = scalar_select %p380, %s381, %s382
      %p386 = pneg %p380
      %p387 = scmp.eq.s32.totalorder %s26, 3
      %p388 = por %p386, %p387
      %p389 = scmp.ne.s32.totalorder %s381, %s384
      %p390 = scmp.eq.s32.totalorder %s26, 0
      %p391 = por %p389, %p390
      %p392 = scmp.ne.s32.totalorder %s381, %s384
      %p393 = scmp.eq.s32.totalorder %s31, 3
      %p394 = por %p392, %p393
      %p395 = scmp.ne.s32.totalorder %s384, %s385
      %p396 = scmp.eq.s32.totalorder %s31, 0
      %p397 = por %p395, %p396
      %p398 = scmp.ne.s32.totalorder %s384, %s385
      %p399 = scmp.eq.s32.totalorder %s32, 3
      %p400 = por %p398, %p399
      %p402 = scmp.ne.s32.totalorder %s385, %s401
      %p403 = scmp.eq.s32.totalorder %s32, 0
      %p404 = por %p402, %p403
      %p405 = scmp.le.s32.totalorder 1, %s26
      %p406 = scmp.lt.s32.totalorder %s26, 5
      %p407 = pnand %p405, %p406
      %p408 = pneg %p407
      // Predicated region
      $region9: #{tpu_custom_call.1} parent=5 // pred_check
        _
      $region10: #{tpu_custom_call.1} parent=5 // pred_check_branch
        %410 = sbr.rel (%p407) target = $region12
      $region11: #{tpu_custom_call.1} parent=5 // pred_region
        %s411 = ssub.s32 %s26, 1
        // Predicated region
        $region13: #{tpu_custom_call.1} parent=11 // pred_check
          %p412 = pneg %p59
        $region14: #{tpu_custom_call.1} parent=11 // pred_check_branch
          %414 = sbr.rel (%p412) target = $region16
        $region15: #{tpu_custom_call.1} parent=11 // pred_region
          %s416 = ssub.s32 16, 16
          %417 = vsyncadd [#allocation5], %s416
          %s419 = sshll.u32 %s0, 4
          %s420 = int_to_ptr.vmem [resolvable:$true] %s419
          %422 = dma.vmem_to_smem %s420, 16, [#allocation2], [#allocation5]
        $region16: #{tpu_custom_call.1} parent=11 // pred_fallthru
          _
      $region12: #{tpu_custom_call.1} parent=5 // pred_fallthru
        _
      %p423 = scmp.lt.s32.totalorder %s26, 4
      // Predicated region
      $region17: #{tpu_custom_call.1} parent=5 // pred_check
        %p424 = pneg %p423
      $region18: #{tpu_custom_call.1} parent=5 // pred_check_branch
        %426 = sbr.rel (%p424) target = $region20
      $region19: #{tpu_custom_call.1} parent=5 // pred_region
        // Predicated region
        $region21: #{tpu_custom_call.1} parent=19 // pred_check
          %p427 = pneg %p79
        $region22: #{tpu_custom_call.1} parent=19 // pred_check_branch
          %429 = sbr.rel (%p427) target = $region24
        $region23: #{tpu_custom_call.1} parent=19 // pred_region
          %s430 = sand.u32 %s69, 1
          %s431 = scalar_lea.sflag [#allocation3], %s430
          %s432 = sand.u32 %s69, 1
          %s433 = smul.addr %s432, 8
          %s434 = scalar_lea.vmem [#allocation6], %s433
          %s436 = ssub.s32 128, 128
          %437 = vsyncadd %s431, %s436
          %s438 = smul.addr %s33, 128
          %s439 = scalar_lea.hbm %s1, %s438
          %s441 = sshll.u32 %s434, 4
          %s442 = int_to_ptr.vmem [resolvable:$true] %s441
          %444 = dma.hbm_to_vmem [thread:$0]  %s439, 128, %s442, %s431
        $region24: #{tpu_custom_call.1} parent=19 // pred_fallthru
          _
        // Predicated region
        $region25: #{tpu_custom_call.1} parent=19 // pred_check
          %p445 = pneg %p105
        $region26: #{tpu_custom_call.1} parent=19 // pred_check_branch
          %447 = sbr.rel (%p445) target = $region28
        $region27: #{tpu_custom_call.1} parent=19 // pred_region
          %p448 = scmp.lt.s32.totalorder %s34, 1
          %s449 = scalar_select %p448, %s34, 1
          %s450 = scalar_lea.vmem %s2, %s449
        $region28: #{tpu_custom_call.1} parent=19 // pred_fallthru
          _
        // Predicated region
        $region29: #{tpu_custom_call.1} parent=19 // pred_check
          %p451 = pneg %p131
        $region30: #{tpu_custom_call.1} parent=19 // pred_check_branch
          %453 = sbr.rel (%p451) target = $region32
        $region31: #{tpu_custom_call.1} parent=19 // pred_region
          %p454 = scmp.lt.s32.totalorder %s34, 1
          %s455 = scalar_select %p454, %s34, 1
          %s456 = scalar_lea.vmem %s3, %s455
        $region32: #{tpu_custom_call.1} parent=19 // pred_fallthru
          _
        // Predicated region
        $region33: #{tpu_custom_call.1} parent=19 // pred_check
          %p457 = pneg %p157
        $region34: #{tpu_custom_call.1} parent=19 // pred_check_branch
          %459 = sbr.rel (%p457) target = $region36
        $region35: #{tpu_custom_call.1} parent=19 // pred_region
          %p460 = scmp.lt.s32.totalorder %s34, 1
          %s461 = scalar_select %p460, %s34, 1
          %s462 = smul.addr %s461, 8
          %s463 = smul.addr %s462, 4
          %s464 = scalar_lea.vmem %s4, %s463
        $region36: #{tpu_custom_call.1} parent=19 // pred_fallthru
          _
        // Predicated region
        $region37: #{tpu_custom_call.1} parent=19 // pred_check
          %p465 = pneg %p183
        $region38: #{tpu_custom_call.1} parent=19 // pred_check_branch
          %467 = sbr.rel (%p465) target = $region40
        $region39: #{tpu_custom_call.1} parent=19 // pred_region
          %p468 = scmp.lt.s32.totalorder %s34, 1
          %s469 = scalar_select %p468, %s34, 1
          %s470 = scalar_lea.vmem %s5, %s469
        $region40: #{tpu_custom_call.1} parent=19 // pred_fallthru
          _
        // Predicated region
        $region41: #{tpu_custom_call.1} parent=19 // pred_check
          %p471 = pneg %p209
        $region42: #{tpu_custom_call.1} parent=19 // pred_check_branch
          %473 = sbr.rel (%p471) target = $region44
        $region43: #{tpu_custom_call.1} parent=19 // pred_region
          %p474 = scmp.lt.s32.totalorder %s34, 1
          %s475 = scalar_select %p474, %s34, 1
          %s476 = scalar_lea.vmem %s6, %s475
        $region44: #{tpu_custom_call.1} parent=19 // pred_fallthru
          _
        // Predicated region
        $region45: #{tpu_custom_call.1} parent=19 // pred_check
          %p477 = pneg %p235
        $region46: #{tpu_custom_call.1} parent=19 // pred_check_branch
          %479 = sbr.rel (%p477) target = $region48
        $region47: #{tpu_custom_call.1} parent=19 // pred_region
          %p480 = scmp.lt.s32.totalorder %s34, 1
          %s481 = scalar_select %p480, %s34, 1
          %s482 = scalar_lea.vmem %s7, %s481
        $region48: #{tpu_custom_call.1} parent=19 // pred_fallthru
          _
        // Predicated region
        $region49: #{tpu_custom_call.1} parent=19 // pred_check
          %p483 = pneg %p261
        $region50: #{tpu_custom_call.1} parent=19 // pred_check_branch
          %485 = sbr.rel (%p483) target = $region52
        $region51: #{tpu_custom_call.1} parent=19 // pred_region
          %p486 = scmp.lt.s32.totalorder %s34, 1
          %s487 = scalar_select %p486, %s34, 1
          %s488 = scalar_lea.vmem %s8, %s487
        $region52: #{tpu_custom_call.1} parent=19 // pred_fallthru
          _
        // Predicated region
        $region53: #{tpu_custom_call.1} parent=19 // pred_check
          %p489 = pneg %p287
        $region54: #{tpu_custom_call.1} parent=19 // pred_check_branch
          %491 = sbr.rel (%p489) target = $region56
        $region55: #{tpu_custom_call.1} parent=19 // pred_region
          %p492 = scmp.lt.s32.totalorder %s34, 1
          %s493 = scalar_select %p492, %s34, 1
          %s494 = smul.addr %s493, 4
          %s495 = smul.addr %s494, 4
          %s496 = scalar_lea.vmem %s9, %s495
        $region56: #{tpu_custom_call.1} parent=19 // pred_fallthru
          _
        // Predicated region
        $region57: #{tpu_custom_call.1} parent=19 // pred_check
          %p497 = pneg %p313
        $region58: #{tpu_custom_call.1} parent=19 // pred_check_branch
          %499 = sbr.rel (%p497) target = $region60
        $region59: #{tpu_custom_call.1} parent=19 // pred_region
          %p500 = scmp.lt.s32.totalorder %s34, 1
          %s501 = scalar_select %p500, %s34, 1
          %s502 = scalar_lea.vmem %s10, %s501
        $region60: #{tpu_custom_call.1} parent=19 // pred_fallthru
          _
        // Predicated region
        $region61: #{tpu_custom_call.1} parent=19 // pred_check
          %p503 = pneg %p339
        $region62: #{tpu_custom_call.1} parent=19 // pred_check_branch
          %505 = sbr.rel (%p503) target = $region64
        $region63: #{tpu_custom_call.1} parent=19 // pred_region
          %p506 = scmp.lt.s32.totalorder %s34, 1
          %s507 = scalar_select %p506, %s34, 1
          %s508 = smul.addr %s507, 16
          %s509 = smul.addr %s508, 4
          %s510 = scalar_lea.vmem %s11, %s509
        $region64: #{tpu_custom_call.1} parent=19 // pred_fallthru
          _
        // Predicated region
        $region65: #{tpu_custom_call.1} parent=19 // pred_check
          %p511 = pneg %p365
        $region66: #{tpu_custom_call.1} parent=19 // pred_check_branch
          %513 = sbr.rel (%p511) target = $region68
        $region67: #{tpu_custom_call.1} parent=19 // pred_region
          %p514 = scmp.lt.s32.totalorder %s34, 1
          %s515 = scalar_select %p514, %s34, 1
          %s516 = scalar_lea.vmem %s12, %s515
        $region68: #{tpu_custom_call.1} parent=19 // pred_fallthru
          _
      $region20: #{tpu_custom_call.1} parent=5 // pred_fallthru
        _
      %p517 = scmp.le.s32.totalorder 1, %s26
      %p518 = scmp.lt.s32.totalorder %s26, 5
      %p519 = pnand %p517, %p518
      %p520 = pneg %p519
      // Predicated region
      $region69: #{tpu_custom_call.1} parent=5 // pred_check
        _
      $region70: #{tpu_custom_call.1} parent=5 // pred_check_branch
        %522 = sbr.rel (%p519) target = $region72
      $region71: #{tpu_custom_call.1} parent=5 // pred_region
        %s523 = ssub.s32 %s26, 1
        // Predicated region
        $region73: #{tpu_custom_call.1} parent=71 // pred_check
          %p524 = pneg %p59
        $region74: #{tpu_custom_call.1} parent=71 // pred_check_branch
          %526 = sbr.rel (%p524) target = $region76
        $region75: #{tpu_custom_call.1} parent=71 // pred_region
          %527 = dma.done [#allocation5], 16
        $region76: #{tpu_custom_call.1} parent=71 // pred_fallthru
          _
        %s528 = sand.u32 %s72, 1
        %s529 = scalar_lea.sflag [#allocation3], %s528
        %s530 = sand.u32 %s72, 1
        %s531 = smul.addr %s530, 8
        %s532 = scalar_lea.vmem [#allocation6], %s531
        // Predicated region
        $region77: #{tpu_custom_call.1} parent=71 // pred_check
          %p533 = pneg %p85
        $region78: #{tpu_custom_call.1} parent=71 // pred_check_branch
          %535 = sbr.rel (%p533) target = $region80
        $region79: #{tpu_custom_call.1} parent=71 // pred_region
          %536 = dma.done %s529, 128
        $region80: #{tpu_custom_call.1} parent=71 // pred_fallthru
          _
        %537 = sfence
        %p538 = pneg %p59
        %p539 = pneg %p56
        %s540 = sand.u32 %s72, 1
        %s541 = scalar_lea.sflag [#allocation3], %s540
        %s542 = sand.u32 %s72, 1
        %s543 = smul.addr %s542, 8
        %s544 = scalar_lea.vmem [#allocation6], %s543
        %p545 = pneg %p85
        %p546 = pneg %p82
        %p547 = scmp.lt.s32.totalorder %s36, 1
        %s548 = scalar_select %p547, %s36, 1
        %s549 = scalar_lea.vmem %s2, %s548
        %p550 = pneg %p111
        %p551 = pneg %p108
        %p552 = scmp.lt.s32.totalorder %s36, 1
        %s553 = scalar_select %p552, %s36, 1
        %s554 = scalar_lea.vmem %s3, %s553
        %p555 = pneg %p137
        %p556 = pneg %p134
        %p557 = scmp.lt.s32.totalorder %s36, 1
        %s558 = scalar_select %p557, %s36, 1
        %s559 = smul.addr %s558, 8
        %s560 = smul.addr %s559, 4
        %s561 = scalar_lea.vmem %s4, %s560
        %p562 = pneg %p163
        %p563 = pneg %p160
        %p564 = scmp.lt.s32.totalorder %s36, 1
        %s565 = scalar_select %p564, %s36, 1
        %s566 = scalar_lea.vmem %s5, %s565
        %p567 = pneg %p189
        %p568 = pneg %p186
        %p569 = scmp.lt.s32.totalorder %s36, 1
        %s570 = scalar_select %p569, %s36, 1
        %s571 = scalar_lea.vmem %s6, %s570
        %p572 = pneg %p215
        %p573 = pneg %p212
        %p574 = scmp.lt.s32.totalorder %s36, 1
        %s575 = scalar_select %p574, %s36, 1
        %s576 = scalar_lea.vmem %s7, %s575
        %p577 = pneg %p241
        %p578 = pneg %p238
        %p579 = scmp.lt.s32.totalorder %s36, 1
        %s580 = scalar_select %p579, %s36, 1
        %s581 = scalar_lea.vmem %s8, %s580
        %p582 = pneg %p267
        %p583 = pneg %p264
        %p584 = scmp.lt.s32.totalorder %s36, 1
        %s585 = scalar_select %p584, %s36, 1
        %s586 = smul.addr %s585, 4
        %s587 = smul.addr %s586, 4
        %s588 = scalar_lea.vmem %s9, %s587
        %p589 = pneg %p293
        %p590 = pneg %p290
        %p591 = scmp.lt.s32.totalorder %s36, 1
        %s592 = scalar_select %p591, %s36, 1
        %s593 = scalar_lea.vmem %s10, %s592
        %p594 = pneg %p319
        %p595 = pneg %p316
        %p596 = scmp.lt.s32.totalorder %s36, 1
        %s597 = scalar_select %p596, %s36, 1
        %s598 = smul.addr %s597, 16
        %s599 = smul.addr %s598, 4
        %s600 = scalar_lea.vmem %s11, %s599
        %p601 = pneg %p345
        %p602 = pneg %p342
        %p603 = scmp.lt.s32.totalorder %s36, 1
        %s604 = scalar_select %p603, %s36, 1
        %s605 = scalar_lea.vmem %s12, %s604
        %p606 = pneg %p371
        %p607 = pneg %p368
        %p608 = pneg %p397
        %p609 = pneg %p394
        %s610 = sand.u32 %s384, 1
        %s611 = scalar_lea.sflag [#allocation4], %s610
        %s612 = sand.u32 %s384, 1
        %s613 = smul.addr %s612, 8
        %s614 = scalar_lea.vmem [#allocation7], %s613
        %p615 = scmp.lt.s32.totalorder %s36, 1
        %s616 = scalar_select %p615, %s36, 1
        %s617 = scalar_lea.vmem %s2, %s616
        %p618 = scmp.lt.s32.totalorder %s36, 1
        %s619 = scalar_select %p618, %s36, 1
        %s620 = scalar_lea.vmem %s3, %s619
        %p621 = scmp.lt.s32.totalorder %s36, 1
        %s622 = scalar_select %p621, %s36, 1
        %s623 = smul.addr %s622, 8
        %s624 = smul.addr %s623, 4
        %s625 = scalar_lea.vmem %s4, %s624
        %p626 = scmp.lt.s32.totalorder %s36, 1
        %s627 = scalar_select %p626, %s36, 1
        %s628 = scalar_lea.vmem %s5, %s627
        %p629 = scmp.lt.s32.totalorder %s36, 1
        %s630 = scalar_select %p629, %s36, 1
        %s631 = scalar_lea.vmem %s6, %s630
        %p632 = scmp.lt.s32.totalorder %s36, 1
        %s633 = scalar_select %p632, %s36, 1
        %s634 = scalar_lea.vmem %s7, %s633
        %p635 = scmp.lt.s32.totalorder %s36, 1
        %s636 = scalar_select %p635, %s36, 1
        %s637 = scalar_lea.vmem %s8, %s636
        %p638 = scmp.lt.s32.totalorder %s36, 1
        %s639 = scalar_select %p638, %s36, 1
        %s640 = smul.addr %s639, 4
        %s641 = smul.addr %s640, 4
        %s642 = scalar_lea.vmem %s9, %s641
        %p643 = scmp.lt.s32.totalorder %s36, 1
        %s644 = scalar_select %p643, %s36, 1
        %s645 = scalar_lea.vmem %s10, %s644
        %p646 = scmp.lt.s32.totalorder %s36, 1
        %s647 = scalar_select %p646, %s36, 1
        %s648 = smul.addr %s647, 16
        %s649 = smul.addr %s648, 4
        %s650 = scalar_lea.vmem %s11, %s649
        %p651 = scmp.lt.s32.totalorder %s36, 1
        %s652 = scalar_select %p651, %s36, 1
        %s653 = scalar_lea.vmem %s12, %s652
        %p655 = scmp.eq.s32.totalorder %s36, 0
        // Predicated region
        $region81: #{tpu_custom_call.1} parent=71 // pred_check
          %p656 = pneg %p655
        $region82: #{tpu_custom_call.1} parent=71 // pred_check_branch
          %658 = sbr.rel (%p656) target = $region84
        $region83: #{tpu_custom_call.1} parent=71 // pred_region
          %v659 = vld [vmem:[%s532] sm:$0xff]
          %vm660 = vcmask 261120
          %661 = vst.msk [vmem:[%s614] sm:$0xff] %vm660, %v659
        $region84: #{tpu_custom_call.1} parent=71 // pred_fallthru
          _
        %s662 = sld [smem:[#allocation2 + %s36]]
        %v663 = vld [vmem:[%s614] sm:$0xff]
        %v664 = vld [vmem:[%s617] sm:$0x1]
        %v665 = vld [vmem:[%s620] sm:$0x1]
        %vm666 = vcmask 261120
        %v667 = vsel %vm666, %v663, 0.0
        %668 = vadd.xlane.f32.xlu0 %v667
        %v669 = vpop.xlane.xlu0 %668
        %v670 = vrcp.pop 32.0
        %v671 = vmul.f32 %v669, %v670
        %v672 = vmul.f32 %v663, %v663
        %v673 = vsel %vm666, %v672, 0.0
        %674 = vadd.xlane.f32.xlu0 %v673
        %v675 = vpop.xlane.xlu0 %674
        %v676 = vmul.f32 %v675, %v670
        %v677 = vmul.f32 %v671, %v671
        %v678 = vsub.f32 %v676, %v677
        %v679 = vsub.f32 %v663, %v671
        %v680 = vadd.f32 %v678, 1e-05
        %v681 = vrsqrt.pop %v680
        %v682 = vmul.f32 %v679, %v681
        %v684 = vlaneseq
        %v685 = vshrl.u32 %v684, 7
        %v686 = vsub.s32 0, %v685
        %v687 = vrot.slane %v664, %v686
        %v689 = vmul.f32 %v682, %v687
        %v691 = vlaneseq
        %v692 = vshrl.u32 %v691, 7
        %v693 = vsub.s32 0, %v692
        %v694 = vrot.slane %v665, %v693
        %v696 = vadd.f32 %v689, %v694
        %v697 = vpack.c.bf16 %v696, %v696
        %v698 = vld [vmem:[%s625] sm:$0xff]
        %v699 = vld [vmem:[%s625 + $0x8] sm:$0xff]
        %v700 = vld [vmem:[%s625 + $0x10] sm:$0xff]
        %v701 = vld [vmem:[%s625 + $0x18] sm:$0xff]
        %v706 = vunpack.c.l.b16 %v698
        %v707 = vunpack.c.h.b16 %v698
        %v708 = vunpack.c.l.b16 %v699
        %v709 = vunpack.c.h.b16 %v699
        %v710 = vunpack.c.l.b16 %v700
        %v711 = vunpack.c.h.b16 %v700
        %v712 = vunpack.c.l.b16 %v701
        %v713 = vunpack.c.h.b16 %v701
        %v714 = vpack.c.b16 %v708, %v706
        %v715 = vpack.c.b16 %v709, %v707
        %v716 = vpack.c.b16 %v712, %v710
        %v717 = vpack.c.b16 %v713, %v711
        %v723 = vsel %vm666, %v697, 0
        %725 = vmatprep.subr.bf16.mxu0 0
        %726 = vmatpush1.bf16.msra.mxu0 0
        %727 = vmatprep.subr.bf16.mxu0 0
        %728 = vmatpush1.bf16.msra.mxu0 0
        %729 = vmatprep.subr.bf16.mxu0 0
        %730 = vmatpush1.bf16.msra.mxu0 0
        %731 = vmatprep.subr.bf16.mxu0 0
        %732 = vmatpush1.bf16.msra.mxu0 0
        %733 = vmatprep.subr.bf16.mxu0 0
        %734 = vmatpush1.bf16.msra.mxu0 0
        %735 = vmatprep.subr.bf16.mxu0 0
        %736 = vmatpush1.bf16.msra.mxu0 0
        %737 = vmatprep.subr.bf16.mxu0 %v717
        %738 = vmatpush1.bf16.msra.mxu0 %v716
        %739 = vmatprep.subr.bf16.mxu0 %v715
        %740 = vmatpush1.bf16.msra.mxu0 %v714
        %741 = vmatprep.subr.bf16.mxu0 0
        %742 = vmatpush2.bf16.msra.mxu0 0
        %743 = vmatprep.subr.bf16.mxu0 0
        %744 = vmatpush2.bf16.msra.mxu0 0
        %745 = vmatprep.subr.bf16.mxu0 0
        %746 = vmatpush2.bf16.msra.mxu0 0
        %747 = vmatprep.subr.bf16.mxu0 0
        %748 = vmatpush2.bf16.msra.mxu0 0
        %749 = vmatprep.subr.bf16.mxu0 0
        %750 = vmatpush2.bf16.msra.mxu0 0
        %751 = vmatprep.subr.bf16.mxu0 0
        %752 = vmatpush2.bf16.msra.mxu0 0
        %753 = vmatprep.subr.bf16.mxu0 0
        %754 = vmatpush2.bf16.msra.mxu0 0
        %755 = vmatprep.subr.bf16.mxu0 0
        %756 = vmatpush2.bf16.msra.mxu0 0
        %757 = vmatprep.mubr.bf16.mxu0 0
        %758 = vmatmul.mubr.bf16.gmra.mxu0 %v723
        %v759 = vpop.f32.mrf.mxu0
        %v760 = vadd.f32 0.0, %v759
        %v761 = vpop.f32.mrf.mxu0
        %v762 = vadd.f32 0.0, %v761
        %v763 = vpop.f32.mrf.mxu0
        %v764 = vpop.f32.mrf.mxu0
        %765 = vdwg.mxu0
        %767 = vrot.lane.b32.xlu0 %v760, 120
        %v768 = vpop.permute.xlu0 %767
        %770 = vrot.lane.b32.xlu0 %v760, 112
        %v771 = vpop.permute.xlu0 %770
        %773 = vrot.lane.b32.xlu0 %v760, 104
        %v774 = vpop.permute.xlu0 %773
        %776 = vrot.lane.b32.xlu0 %v760, 96
        %v777 = vpop.permute.xlu0 %776
        %779 = vrot.lane.b32.xlu0 %v760, 88
        %v780 = vpop.permute.xlu0 %779
        %782 = vrot.lane.b32.xlu0 %v760, 80
        %v783 = vpop.permute.xlu0 %782
        %785 = vrot.lane.b32.xlu0 %v760, 72
        %v786 = vpop.permute.xlu0 %785
        %v788 = vmul.f32 %v760, 0.35355338
        %v789 = vmul.f32 %v768, 0.35355338
        %v790 = vmul.f32 %v771, 0.35355338
        %v791 = vmul.f32 %v774, 0.35355338
        %v792 = vmul.f32 %v777, 0.35355338
        %v793 = vmul.f32 %v780, 0.35355338
        %v794 = vmul.f32 %v783, 0.35355338
        %v795 = vmul.f32 %v786, 0.35355338
        %v796 = vpack.c.bf16 %v788, %v788
        %v797 = vpack.c.bf16 %v789, %v789
        %v798 = vpack.c.bf16 %v790, %v790
        %v799 = vpack.c.bf16 %v791, %v791
        %v800 = vpack.c.bf16 %v792, %v792
        %v801 = vpack.c.bf16 %v793, %v793
        %v802 = vpack.c.bf16 %v794, %v794
        %v803 = vpack.c.bf16 %v795, %v795
        %v804 = vpack.c.bf16 %v760, %v760
        %v805 = vpack.c.bf16 %v768, %v768
        %v806 = vpack.c.bf16 %v771, %v771
        %v807 = vpack.c.bf16 %v774, %v774
        %v808 = vpack.c.bf16 %v777, %v777
        %v809 = vpack.c.bf16 %v780, %v780
        %v810 = vpack.c.bf16 %v783, %v783
        %v811 = vpack.c.bf16 %v786, %v786
        %813 = vrot.lane.b32.xlu0 %v762, 120
        %v814 = vpop.permute.xlu0 %813
        %816 = vrot.lane.b32.xlu0 %v762, 112
        %v817 = vpop.permute.xlu0 %816
        %819 = vrot.lane.b32.xlu0 %v762, 104
        %v820 = vpop.permute.xlu0 %819
        %v822 = vpack.c.bf16 %v762, %v762
        %v823 = vpack.c.bf16 %v814, %v814
        %v824 = vpack.c.bf16 %v817, %v817
        %v825 = vpack.c.bf16 %v820, %v820
        %827 = vrot.lane.b32.xlu0 %v804, 64
        %v828 = vpop.permute.xlu0 %827
        %vm829 = vcmask 64512
        %v831 = vsel %vm829, %v796, 0
        %v834 = vsel %vm829, %v828, 0
        %836 = vmatprep.subr.bf16.mxu0 0
        %837 = vmatpush1.bf16.xpose.msra.mxu0 0
        %838 = vmatprep.subr.bf16.mxu0 0
        %839 = vmatpush1.bf16.xpose.msra.mxu0 0
        %840 = vmatprep.subr.bf16.mxu0 0
        %841 = vmatpush1.bf16.xpose.msra.mxu0 0
        %842 = vmatprep.subr.bf16.mxu0 0
        %843 = vmatpush1.bf16.xpose.msra.mxu0 0
        %844 = vmatprep.subr.bf16.mxu0 0
        %845 = vmatpush1.bf16.xpose.msra.mxu0 0
        %846 = vmatprep.subr.bf16.mxu0 0
        %847 = vmatpush1.bf16.xpose.msra.mxu0 0
        %848 = vmatprep.subr.bf16.mxu0 0
        %849 = vmatpush1.bf16.xpose.msra.mxu0 0
        %850 = vmatprep.subr.bf16.mxu0 0
        %851 = vmatpush1.bf16.xpose.msra.mxu0 %v834
        %852 = vmatprep.subr.bf16.mxu0 0
        %853 = vmatpush2.bf16.xpose.msra.mxu0 0
        %854 = vmatprep.subr.bf16.mxu0 0
        %855 = vmatpush2.bf16.xpose.msra.mxu0 0
        %856 = vmatprep.subr.bf16.mxu0 0
        %857 = vmatpush2.bf16.xpose.msra.mxu0 0
        %858 = vmatprep.subr.bf16.mxu0 0
        %859 = vmatpush2.bf16.xpose.msra.mxu0 0
        %860 = vmatprep.subr.bf16.mxu0 0
        %861 = vmatpush2.bf16.xpose.msra.mxu0 0
        %862 = vmatprep.subr.bf16.mxu0 0
        %863 = vmatpush2.bf16.xpose.msra.mxu0 0
        %864 = vmatprep.subr.bf16.mxu0 0
        %865 = vmatpush2.bf16.xpose.msra.mxu0 0
        %866 = vmatprep.subr.bf16.mxu0 0
        %867 = vmatpush2.bf16.xpose.msra.mxu0 0
        %868 = vmatprep.mubr.bf16.mxu0 0
        %869 = vmatmul.mubr.bf16.gmra.mxu0 %v831
        %v870 = vpop.f32.mrf.mxu0
        %v871 = vadd.f32 0.0, %v870
        %v872 = vpop.f32.mrf.mxu0
        %v873 = vpop.f32.mrf.mxu0
        %v874 = vpop.f32.mrf.mxu0
        %875 = vdwg.mxu0
        %877 = vrot.lane.b32.xlu0 %v805, 64
        %v878 = vpop.permute.xlu0 %877
        %v880 = vsel %vm829, %v797, 0
        %v883 = vsel %vm829, %v878, 0
        %885 = vmatprep.subr.bf16.mxu0 0
        %886 = vmatpush1.bf16.xpose.msra.mxu0 0
        %887 = vmatprep.subr.bf16.mxu0 0
        %888 = vmatpush1.bf16.xpose.msra.mxu0 0
        %889 = vmatprep.subr.bf16.mxu0 0
        %890 = vmatpush1.bf16.xpose.msra.mxu0 0
        %891 = vmatprep.subr.bf16.mxu0 0
        %892 = vmatpush1.bf16.xpose.msra.mxu0 0
        %893 = vmatprep.subr.bf16.mxu0 0
        %894 = vmatpush1.bf16.xpose.msra.mxu0 0
        %895 = vmatprep.subr.bf16.mxu0 0
        %896 = vmatpush1.bf16.xpose.msra.mxu0 0
        %897 = vmatprep.subr.bf16.mxu0 0
        %898 = vmatpush1.bf16.xpose.msra.mxu0 0
        %899 = vmatprep.subr.bf16.mxu0 0
        %900 = vmatpush1.bf16.xpose.msra.mxu0 %v883
        %901 = vmatprep.subr.bf16.mxu0 0
        %902 = vmatpush2.bf16.xpose.msra.mxu0 0
        %903 = vmatprep.subr.bf16.mxu0 0
        %904 = vmatpush2.bf16.xpose.msra.mxu0 0
        %905 = vmatprep.subr.bf16.mxu0 0
        %906 = vmatpush2.bf16.xpose.msra.mxu0 0
        %907 = vmatprep.subr.bf16.mxu0 0
        %908 = vmatpush2.bf16.xpose.msra.mxu0 0
        %909 = vmatprep.subr.bf16.mxu0 0
        %910 = vmatpush2.bf16.xpose.msra.mxu0 0
        %911 = vmatprep.subr.bf16.mxu0 0
        %912 = vmatpush2.bf16.xpose.msra.mxu0 0
        %913 = vmatprep.subr.bf16.mxu0 0
        %914 = vmatpush2.bf16.xpose.msra.mxu0 0
        %915 = vmatprep.subr.bf16.mxu0 0
        %916 = vmatpush2.bf16.xpose.msra.mxu0 0
        %917 = vmatprep.mubr.bf16.mxu0 0
        %918 = vmatmul.mubr.bf16.gmra.mxu0 %v880
        %v919 = vpop.f32.mrf.mxu0
        %v920 = vadd.f32 0.0, %v919
        %v921 = vpop.f32.mrf.mxu0
        %v922 = vpop.f32.mrf.mxu0
        %v923 = vpop.f32.mrf.mxu0
        %924 = vdwg.mxu0
        %926 = vrot.lane.b32.xlu0 %v806, 64
        %v927 = vpop.permute.xlu0 %926
        %v929 = vsel %vm829, %v798, 0
        %v932 = vsel %vm829, %v927, 0
        %934 = vmatprep.subr.bf16.mxu0 0
        %935 = vmatpush1.bf16.xpose.msra.mxu0 0
        %936 = vmatprep.subr.bf16.mxu0 0
        %937 = vmatpush1.bf16.xpose.msra.mxu0 0
        %938 = vmatprep.subr.bf16.mxu0 0
        %939 = vmatpush1.bf16.xpose.msra.mxu0 0
        %940 = vmatprep.subr.bf16.mxu0 0
        %941 = vmatpush1.bf16.xpose.msra.mxu0 0
        %942 = vmatprep.subr.bf16.mxu0 0
        %943 = vmatpush1.bf16.xpose.msra.mxu0 0
        %944 = vmatprep.subr.bf16.mxu0 0
        %945 = vmatpush1.bf16.xpose.msra.mxu0 0
        %946 = vmatprep.subr.bf16.mxu0 0
        %947 = vmatpush1.bf16.xpose.msra.mxu0 0
        %948 = vmatprep.subr.bf16.mxu0 0
        %949 = vmatpush1.bf16.xpose.msra.mxu0 %v932
        %950 = vmatprep.subr.bf16.mxu0 0
        %951 = vmatpush2.bf16.xpose.msra.mxu0 0
        %952 = vmatprep.subr.bf16.mxu0 0
        %953 = vmatpush2.bf16.xpose.msra.mxu0 0
        %954 = vmatprep.subr.bf16.mxu0 0
        %955 = vmatpush2.bf16.xpose.msra.mxu0 0
        %956 = vmatprep.subr.bf16.mxu0 0
        %957 = vmatpush2.bf16.xpose.msra.mxu0 0
        %958 = vmatprep.subr.bf16.mxu0 0
        %959 = vmatpush2.bf16.xpose.msra.mxu0 0
        %960 = vmatprep.subr.bf16.mxu0 0
        %961 = vmatpush2.bf16.xpose.msra.mxu0 0
        %962 = vmatprep.subr.bf16.mxu0 0
        %963 = vmatpush2.bf16.xpose.msra.mxu0 0
        %964 = vmatprep.subr.bf16.mxu0 0
        %965 = vmatpush2.bf16.xpose.msra.mxu0 0
        %966 = vmatprep.mubr.bf16.mxu0 0
        %967 = vmatmul.mubr.bf16.gmra.mxu0 %v929
        %v968 = vpop.f32.mrf.mxu0
        %v969 = vadd.f32 0.0, %v968
        %v970 = vpop.f32.mrf.mxu0
        %v971 = vpop.f32.mrf.mxu0
        %v972 = vpop.f32.mrf.mxu0
        %973 = vdwg.mxu0
        %975 = vrot.lane.b32.xlu0 %v807, 64
        %v976 = vpop.permute.xlu0 %975
        %v978 = vsel %vm829, %v799, 0
        %v981 = vsel %vm829, %v976, 0
        %983 = vmatprep.subr.bf16.mxu0 0
        %984 = vmatpush1.bf16.xpose.msra.mxu0 0
        %985 = vmatprep.subr.bf16.mxu0 0
        %986 = vmatpush1.bf16.xpose.msra.mxu0 0
        %987 = vmatprep.subr.bf16.mxu0 0
        %988 = vmatpush1.bf16.xpose.msra.mxu0 0
        %989 = vmatprep.subr.bf16.mxu0 0
        %990 = vmatpush1.bf16.xpose.msra.mxu0 0
        %991 = vmatprep.subr.bf16.mxu0 0
        %992 = vmatpush1.bf16.xpose.msra.mxu0 0
        %993 = vmatprep.subr.bf16.mxu0 0
        %994 = vmatpush1.bf16.xpose.msra.mxu0 0
        %995 = vmatprep.subr.bf16.mxu0 0
        %996 = vmatpush1.bf16.xpose.msra.mxu0 0
        %997 = vmatprep.subr.bf16.mxu0 0
        %998 = vmatpush1.bf16.xpose.msra.mxu0 %v981
        %999 = vmatprep.subr.bf16.mxu0 0
        %1000 = vmatpush2.bf16.xpose.msra.mxu0 0
        %1001 = vmatprep.subr.bf16.mxu0 0
        %1002 = vmatpush2.bf16.xpose.msra.mxu0 0
        %1003 = vmatprep.subr.bf16.mxu0 0
        %1004 = vmatpush2.bf16.xpose.msra.mxu0 0
        %1005 = vmatprep.subr.bf16.mxu0 0
        %1006 = vmatpush2.bf16.xpose.msra.mxu0 0
        %1007 = vmatprep.subr.bf16.mxu0 0
        %1008 = vmatpush2.bf16.xpose.msra.mxu0 0
        %1009 = vmatprep.subr.bf16.mxu0 0
        %1010 = vmatpush2.bf16.xpose.msra.mxu0 0
        %1011 = vmatprep.subr.bf16.mxu0 0
        %1012 = vmatpush2.bf16.xpose.msra.mxu0 0
        %1013 = vmatprep.subr.bf16.mxu0 0
        %1014 = vmatpush2.bf16.xpose.msra.mxu0 0
        %1015 = vmatprep.mubr.bf16.mxu0 0
        %1016 = vmatmul.mubr.bf16.gmra.mxu0 %v978
        %v1017 = vpop.f32.mrf.mxu0
        %v1018 = vadd.f32 0.0, %v1017
        %v1019 = vpop.f32.mrf.mxu0
        %v1020 = vpop.f32.mrf.mxu0
        %v1021 = vpop.f32.mrf.mxu0
        %1022 = vdwg.mxu0
        %1024 = vrot.lane.b32.xlu0 %v808, 64
        %v1025 = vpop.permute.xlu0 %1024
        %v1027 = vsel %vm829, %v800, 0
        %v1030 = vsel %vm829, %v1025, 0
        %1032 = vmatprep.subr.bf16.mxu0 0
        %1033 = vmatpush1.bf16.xpose.msra.mxu0 0
        %1034 = vmatprep.subr.bf16.mxu0 0
        %1035 = vmatpush1.bf16.xpose.msra.mxu0 0
        %1036 = vmatprep.subr.bf16.mxu0 0
        %1037 = vmatpush1.bf16.xpose.msra.mxu0 0
        %1038 = vmatprep.subr.bf16.mxu0 0
        %1039 = vmatpush1.bf16.xpose.msra.mxu0 0
        %1040 = vmatprep.subr.bf16.mxu0 0
        %1041 = vmatpush1.bf16.xpose.msra.mxu0 0
        %1042 = vmatprep.subr.bf16.mxu0 0
        %1043 = vmatpush1.bf16.xpose.msra.mxu0 0
        %1044 = vmatprep.subr.bf16.mxu0 0
        %1045 = vmatpush1.bf16.xpose.msra.mxu0 0
        %1046 = vmatprep.subr.bf16.mxu0 0
        %1047 = vmatpush1.bf16.xpose.msra.mxu0 %v1030
        %1048 = vmatprep.subr.bf16.mxu0 0
        %1049 = vmatpush2.bf16.xpose.msra.mxu0 0
        %1050 = vmatprep.subr.bf16.mxu0 0
        %1051 = vmatpush2.bf16.xpose.msra.mxu0 0
        %1052 = vmatprep.subr.bf16.mxu0 0
        %1053 = vmatpush2.bf16.xpose.msra.mxu0 0
        %1054 = vmatprep.subr.bf16.mxu0 0
        %1055 = vmatpush2.bf16.xpose.msra.mxu0 0
        %1056 = vmatprep.subr.bf16.mxu0 0
        %1057 = vmatpush2.bf16.xpose.msra.mxu0 0
        %1058 = vmatprep.subr.bf16.mxu0 0
        %1059 = vmatpush2.bf16.xpose.msra.mxu0 0
        %1060 = vmatprep.subr.bf16.mxu0 0
        %1061 = vmatpush2.bf16.xpose.msra.mxu0 0
        %1062 = vmatprep.subr.bf16.mxu0 0
        %1063 = vmatpush2.bf16.xpose.msra.mxu0 0
        %1064 = vmatprep.mubr.bf16.mxu0 0
        %1065 = vmatmul.mubr.bf16.gmra.mxu0 %v1027
        %v1066 = vpop.f32.mrf.mxu0
        %v1067 = vadd.f32 0.0, %v1066
        %v1068 = vpop.f32.mrf.mxu0
        %v1069 = vpop.f32.mrf.mxu0
        %v1070 = vpop.f32.mrf.mxu0
        %1071 = vdwg.mxu0
        %1073 = vrot.lane.b32.xlu0 %v809, 64
        %v1074 = vpop.permute.xlu0 %1073
        %v1076 = vsel %vm829, %v801, 0
        %v1079 = vsel %vm829, %v1074, 0
        %1081 = vmatprep.subr.bf16.mxu0 0
        %1082 = vmatpush1.bf16.xpose.msra.mxu0 0
        %1083 = vmatprep.subr.bf16.mxu0 0
        %1084 = vmatpush1.bf16.xpose.msra.mxu0 0
        %1085 = vmatprep.subr.bf16.mxu0 0
        %1086 = vmatpush1.bf16.xpose.msra.mxu0 0
        %1087 = vmatprep.subr.bf16.mxu0 0
        %1088 = vmatpush1.bf16.xpose.msra.mxu0 0
        %1089 = vmatprep.subr.bf16.mxu0 0
        %1090 = vmatpush1.bf16.xpose.msra.mxu0 0
        %1091 = vmatprep.subr.bf16.mxu0 0
        %1092 = vmatpush1.bf16.xpose.msra.mxu0 0
        %1093 = vmatprep.subr.bf16.mxu0 0
        %1094 = vmatpush1.bf16.xpose.msra.mxu0 0
        %1095 = vmatprep.subr.bf16.mxu0 0
        %1096 = vmatpush1.bf16.xpose.msra.mxu0 %v1079
        %1097 = vmatprep.subr.bf16.mxu0 0
        %1098 = vmatpush2.bf16.xpose.msra.mxu0 0
        %1099 = vmatprep.subr.bf16.mxu0 0
        %1100 = vmatpush2.bf16.xpose.msra.mxu0 0
        %1101 = vmatprep.subr.bf16.mxu0 0
        %1102 = vmatpush2.bf16.xpose.msra.mxu0 0
        %1103 = vmatprep.subr.bf16.mxu0 0
        %1104 = vmatpush2.bf16.xpose.msra.mxu0 0
        %1105 = vmatprep.subr.bf16.mxu0 0
        %1106 = vmatpush2.bf16.xpose.msra.mxu0 0
        %1107 = vmatprep.subr.bf16.mxu0 0
        %1108 = vmatpush2.bf16.xpose.msra.mxu0 0
        %1109 = vmatprep.subr.bf16.mxu0 0
        %1110 = vmatpush2.bf16.xpose.msra.mxu0 0
        %1111 = vmatprep.subr.bf16.mxu0 0
        %1112 = vmatpush2.bf16.xpose.msra.mxu0 0
        %1113 = vmatprep.mubr.bf16.mxu0 0
        %1114 = vmatmul.mubr.bf16.gmra.mxu0 %v1076
        %v1115 = vpop.f32.mrf.mxu0
        %v1116 = vadd.f32 0.0, %v1115
        %v1117 = vpop.f32.mrf.mxu0
        %v1118 = vpop.f32.mrf.mxu0
        %v1119 = vpop.f32.mrf.mxu0
        %1120 = vdwg.mxu0
        %1122 = vrot.lane.b32.xlu0 %v810, 64
        %v1123 = vpop.permute.xlu0 %1122
        %v1125 = vsel %vm829, %v802, 0
        %v1128 = vsel %vm829, %v1123, 0
        %1130 = vmatprep.subr.bf16.mxu0 0
        %1131 = vmatpush1.bf16.xpose.msra.mxu0 0
        %1132 = vmatprep.subr.bf16.mxu0 0
        %1133 = vmatpush1.bf16.xpose.msra.mxu0 0
        %1134 = vmatprep.subr.bf16.mxu0 0
        %1135 = vmatpush1.bf16.xpose.msra.mxu0 0
        %1136 = vmatprep.subr.bf16.mxu0 0
        %1137 = vmatpush1.bf16.xpose.msra.mxu0 0
        %1138 = vmatprep.subr.bf16.mxu0 0
        %1139 = vmatpush1.bf16.xpose.msra.mxu0 0
        %1140 = vmatprep.subr.bf16.mxu0 0
        %1141 = vmatpush1.bf16.xpose.msra.mxu0 0
        %1142 = vmatprep.subr.bf16.mxu0 0
        %1143 = vmatpush1.bf16.xpose.msra.mxu0 0
        %1144 = vmatprep.subr.bf16.mxu0 0
        %1145 = vmatpush1.bf16.xpose.msra.mxu0 %v1128
        %1146 = vmatprep.subr.bf16.mxu0 0
        %1147 = vmatpush2.bf16.xpose.msra.mxu0 0
        %1148 = vmatprep.subr.bf16.mxu0 0
        %1149 = vmatpush2.bf16.xpose.msra.mxu0 0
        %1150 = vmatprep.subr.bf16.mxu0 0
        %1151 = vmatpush2.bf16.xpose.msra.mxu0 0
        %1152 = vmatprep.subr.bf16.mxu0 0
        %1153 = vmatpush2.bf16.xpose.msra.mxu0 0
        %1154 = vmatprep.subr.bf16.mxu0 0
        %1155 = vmatpush2.bf16.xpose.msra.mxu0 0
        %1156 = vmatprep.subr.bf16.mxu0 0
        %1157 = vmatpush2.bf16.xpose.msra.mxu0 0
        %1158 = vmatprep.subr.bf16.mxu0 0
        %1159 = vmatpush2.bf16.xpose.msra.mxu0 0
        %1160 = vmatprep.subr.bf16.mxu0 0
        %1161 = vmatpush2.bf16.xpose.msra.mxu0 0
        %1162 = vmatprep.mubr.bf16.mxu0 0
        %1163 = vmatmul.mubr.bf16.gmra.mxu0 %v1125
        %v1164 = vpop.f32.mrf.mxu0
        %v1165 = vadd.f32 0.0, %v1164
        %v1166 = vpop.f32.mrf.mxu0
        %v1167 = vpop.f32.mrf.mxu0
        %v1168 = vpop.f32.mrf.mxu0
        %1169 = vdwg.mxu0
        %1171 = vrot.lane.b32.xlu0 %v811, 64
        %v1172 = vpop.permute.xlu0 %1171
        %v1174 = vsel %vm829, %v803, 0
        %v1177 = vsel %vm829, %v1172, 0
        %1179 = vmatprep.subr.bf16.mxu0 0
        %1180 = vmatpush1.bf16.xpose.msra.mxu0 0
        %1181 = vmatprep.subr.bf16.mxu0 0
        %1182 = vmatpush1.bf16.xpose.msra.mxu0 0
        %1183 = vmatprep.subr.bf16.mxu0 0
        %1184 = vmatpush1.bf16.xpose.msra.mxu0 0
        %1185 = vmatprep.subr.bf16.mxu0 0
        %1186 = vmatpush1.bf16.xpose.msra.mxu0 0
        %1187 = vmatprep.subr.bf16.mxu0 0
        %1188 = vmatpush1.bf16.xpose.msra.mxu0 0
        %1189 = vmatprep.subr.bf16.mxu0 0
        %1190 = vmatpush1.bf16.xpose.msra.mxu0 0
        %1191 = vmatprep.subr.bf16.mxu0 0
        %1192 = vmatpush1.bf16.xpose.msra.mxu0 0
        %1193 = vmatprep.subr.bf16.mxu0 0
        %1194 = vmatpush1.bf16.xpose.msra.mxu0 %v1177
        %1195 = vmatprep.subr.bf16.mxu0 0
        %1196 = vmatpush2.bf16.xpose.msra.mxu0 0
        %1197 = vmatprep.subr.bf16.mxu0 0
        %1198 = vmatpush2.bf16.xpose.msra.mxu0 0
        %1199 = vmatprep.subr.bf16.mxu0 0
        %1200 = vmatpush2.bf16.xpose.msra.mxu0 0
        %1201 = vmatprep.subr.bf16.mxu0 0
        %1202 = vmatpush2.bf16.xpose.msra.mxu0 0
        %1203 = vmatprep.subr.bf16.mxu0 0
        %1204 = vmatpush2.bf16.xpose.msra.mxu0 0
        %1205 = vmatprep.subr.bf16.mxu0 0
        %1206 = vmatpush2.bf16.xpose.msra.mxu0 0
        %1207 = vmatprep.subr.bf16.mxu0 0
        %1208 = vmatpush2.bf16.xpose.msra.mxu0 0
        %1209 = vmatprep.subr.bf16.mxu0 0
        %1210 = vmatpush2.bf16.xpose.msra.mxu0 0
        %1211 = vmatprep.mubr.bf16.mxu0 0
        %1212 = vmatmul.mubr.bf16.gmra.mxu0 %v1174
        %v1213 = vpop.f32.mrf.mxu0
        %v1214 = vadd.f32 0.0, %v1213
        %v1215 = vpop.f32.mrf.mxu0
        %v1216 = vpop.f32.mrf.mxu0
        %v1217 = vpop.f32.mrf.mxu0
        %1218 = vdwg.mxu0
        %v1219 = vsel %vm829, %v871, -inf
        %1220 = vmax.xlane.f32.xlu0 %v1219
        %v1221 = vpop.xlane.xlu0 %1220
        %v1222 = vsel %vm829, %v920, -inf
        %1223 = vmax.xlane.f32.xlu0 %v1222
        %v1224 = vpop.xlane.xlu0 %1223
        %v1225 = vsel %vm829, %v969, -inf
        %1226 = vmax.xlane.f32.xlu0 %v1225
        %v1227 = vpop.xlane.xlu0 %1226
        %v1228 = vsel %vm829, %v1018, -inf
        %1229 = vmax.xlane.f32.xlu0 %v1228
        %v1230 = vpop.xlane.xlu0 %1229
        %v1231 = vsel %vm829, %v1067, -inf
        %1232 = vmax.xlane.f32.xlu0 %v1231
        %v1233 = vpop.xlane.xlu0 %1232
        %v1234 = vsel %vm829, %v1116, -inf
        %1235 = vmax.xlane.f32.xlu0 %v1234
        %v1236 = vpop.xlane.xlu0 %1235
        %v1237 = vsel %vm829, %v1165, -inf
        %1238 = vmax.xlane.f32.xlu0 %v1237
        %v1239 = vpop.xlane.xlu0 %1238
        %v1240 = vsel %vm829, %v1214, -inf
        %1241 = vmax.xlane.f32.xlu0 %v1240
        %v1242 = vpop.xlane.xlu0 %1241
        %v1243 = vsub.f32 %v871, %v1221
        %v1244 = vsub.f32 %v920, %v1224
        %v1245 = vsub.f32 %v969, %v1227
        %v1246 = vsub.f32 %v1018, %v1230
        %v1247 = vsub.f32 %v1067, %v1233
        %v1248 = vsub.f32 %v1116, %v1236
        %v1249 = vsub.f32 %v1165, %v1239
        %v1250 = vsub.f32 %v1214, %v1242
        %v1251 = vmul.f32 %v1243, 1.442695
        %v1252 = vpow.pop %v1251
        %v1253 = vmul.f32 %v1244, 1.442695
        %v1254 = vpow.pop %v1253
        %v1255 = vmul.f32 %v1245, 1.442695
        %v1256 = vpow.pop %v1255
        %v1257 = vmul.f32 %v1246, 1.442695
        %v1258 = vpow.pop %v1257
        %v1259 = vmul.f32 %v1247, 1.442695
        %v1260 = vpow.pop %v1259
        %v1261 = vmul.f32 %v1248, 1.442695
        %v1262 = vpow.pop %v1261
        %v1263 = vmul.f32 %v1249, 1.442695
        %v1264 = vpow.pop %v1263
        %v1265 = vmul.f32 %v1250, 1.442695
        %v1266 = vpow.pop %v1265
        %v1267 = vsel %vm829, %v1252, 0.0
        %1268 = vadd.xlane.f32.xlu0 %v1267
        %v1269 = vpop.xlane.xlu0 %1268
        %v1270 = vsel %vm829, %v1254, 0.0
        %1271 = vadd.xlane.f32.xlu0 %v1270
        %v1272 = vpop.xlane.xlu0 %1271
        %v1273 = vsel %vm829, %v1256, 0.0
        %1274 = vadd.xlane.f32.xlu0 %v1273
        %v1275 = vpop.xlane.xlu0 %1274
        %v1276 = vsel %vm829, %v1258, 0.0
        %1277 = vadd.xlane.f32.xlu0 %v1276
        %v1278 = vpop.xlane.xlu0 %1277
        %v1279 = vsel %vm829, %v1260, 0.0
        %1280 = vadd.xlane.f32.xlu0 %v1279
        %v1281 = vpop.xlane.xlu0 %1280
        %v1282 = vsel %vm829, %v1262, 0.0
        %1283 = vadd.xlane.f32.xlu0 %v1282
        %v1284 = vpop.xlane.xlu0 %1283
        %v1285 = vsel %vm829, %v1264, 0.0
        %1286 = vadd.xlane.f32.xlu0 %v1285
        %v1287 = vpop.xlane.xlu0 %1286
        %v1288 = vsel %vm829, %v1266, 0.0
        %1289 = vadd.xlane.f32.xlu0 %v1288
        %v1290 = vpop.xlane.xlu0 %1289
        %v1291 = vrcp.pop %v1269
        %v1292 = vrcp.pop %v1272
        %v1293 = vrcp.pop %v1275
        %v1294 = vrcp.pop %v1278
        %v1295 = vrcp.pop %v1281
        %v1296 = vrcp.pop %v1284
        %v1297 = vrcp.pop %v1287
        %v1298 = vrcp.pop %v1290
        %v1299 = vmul.f32 %v1252, %v1291
        %v1300 = vmul.f32 %v1254, %v1292
        %v1301 = vmul.f32 %v1256, %v1293
        %v1302 = vmul.f32 %v1258, %v1294
        %v1303 = vmul.f32 %v1260, %v1295
        %v1304 = vmul.f32 %v1262, %v1296
        %v1305 = vmul.f32 %v1264, %v1297
        %v1306 = vmul.f32 %v1266, %v1298
        %v1307 = vstv %s662
        %v1308 = vmul.f32 %v1307, %v1303
        %v1309 = vmul.f32 %v1307, %v1304
        %v1310 = vmul.f32 %v1307, %v1305
        %v1311 = vmul.f32 %v1307, %v1306
        %v1312 = vsub.f32 %v1299, %v1308
        %v1313 = vsub.f32 %v1300, %v1309
        %v1314 = vsub.f32 %v1301, %v1310
        %v1315 = vsub.f32 %v1302, %v1311
        %v1316 = vpack.c.bf16 %v1312, %v1312
        %v1317 = vpack.c.bf16 %v1313, %v1313
        %v1318 = vpack.c.bf16 %v1314, %v1314
        %v1319 = vpack.c.bf16 %v1315, %v1315
        %v1321 = vsel %vm829, %v1316, 0
        %vm1323 = vcmask 1043456
        %v1325 = vsel %vm1323, %v822, 0
        %1327 = vmatprep.subr.bf16.mxu0 0
        %1328 = vmatpush1.bf16.msra.mxu0 0
        %1329 = vmatprep.subr.bf16.mxu0 0
        %1330 = vmatpush1.bf16.msra.mxu0 0
        %1331 = vmatprep.subr.bf16.mxu0 0
        %1332 = vmatpush1.bf16.msra.mxu0 0
        %1333 = vmatprep.subr.bf16.mxu0 0
        %1334 = vmatpush1.bf16.msra.mxu0 0
        %1335 = vmatprep.subr.bf16.mxu0 0
        %1336 = vmatpush1.bf16.msra.mxu0 0
        %1337 = vmatprep.subr.bf16.mxu0 0
        %1338 = vmatpush1.bf16.msra.mxu0 0
        %1339 = vmatprep.subr.bf16.mxu0 0
        %1340 = vmatpush1.bf16.msra.mxu0 0
        %1341 = vmatprep.subr.bf16.mxu0 0
        %1342 = vmatpush1.bf16.msra.mxu0 %v1325
        %1343 = vmatprep.subr.bf16.mxu0 0
        %1344 = vmatpush2.bf16.msra.mxu0 0
        %1345 = vmatprep.subr.bf16.mxu0 0
        %1346 = vmatpush2.bf16.msra.mxu0 0
        %1347 = vmatprep.subr.bf16.mxu0 0
        %1348 = vmatpush2.bf16.msra.mxu0 0
        %1349 = vmatprep.subr.bf16.mxu0 0
        %1350 = vmatpush2.bf16.msra.mxu0 0
        %1351 = vmatprep.subr.bf16.mxu0 0
        %1352 = vmatpush2.bf16.msra.mxu0 0
        %1353 = vmatprep.subr.bf16.mxu0 0
        %1354 = vmatpush2.bf16.msra.mxu0 0
        %1355 = vmatprep.subr.bf16.mxu0 0
        %1356 = vmatpush2.bf16.msra.mxu0 0
        %1357 = vmatprep.subr.bf16.mxu0 0
        %1358 = vmatpush2.bf16.msra.mxu0 0
        %1359 = vmatprep.mubr.bf16.mxu0 0
        %1360 = vmatmul.mubr.bf16.gmra.mxu0 %v1321
        %v1361 = vpop.f32.mrf.mxu0
        %v1362 = vadd.f32 0.0, %v1361
        %v1363 = vpop.f32.mrf.mxu0
        %v1364 = vpop.f32.mrf.mxu0
        %v1365 = vpop.f32.mrf.mxu0
        %1366 = vdwg.mxu0
        %v1368 = vsel %vm829, %v1317, 0
        %v1371 = vsel %vm1323, %v823, 0
        %1373 = vmatprep.subr.bf16.mxu0 0
        %1374 = vmatpush1.bf16.msra.mxu0 0
        %1375 = vmatprep.subr.bf16.mxu0 0
        %1376 = vmatpush1.bf16.msra.mxu0 0
        %1377 = vmatprep.subr.bf16.mxu0 0
        %1378 = vmatpush1.bf16.msra.mxu0 0
        %1379 = vmatprep.subr.bf16.mxu0 0
        %1380 = vmatpush1.bf16.msra.mxu0 0
        %1381 = vmatprep.subr.bf16.mxu0 0
        %1382 = vmatpush1.bf16.msra.mxu0 0
        %1383 = vmatprep.subr.bf16.mxu0 0
        %1384 = vmatpush1.bf16.msra.mxu0 0
        %1385 = vmatprep.subr.bf16.mxu0 0
        %1386 = vmatpush1.bf16.msra.mxu0 0
        %1387 = vmatprep.subr.bf16.mxu0 0
        %1388 = vmatpush1.bf16.msra.mxu0 %v1371
        %1389 = vmatprep.subr.bf16.mxu0 0
        %1390 = vmatpush2.bf16.msra.mxu0 0
        %1391 = vmatprep.subr.bf16.mxu0 0
        %1392 = vmatpush2.bf16.msra.mxu0 0
        %1393 = vmatprep.subr.bf16.mxu0 0
        %1394 = vmatpush2.bf16.msra.mxu0 0
        %1395 = vmatprep.subr.bf16.mxu0 0
        %1396 = vmatpush2.bf16.msra.mxu0 0
        %1397 = vmatprep.subr.bf16.mxu0 0
        %1398 = vmatpush2.bf16.msra.mxu0 0
        %1399 = vmatprep.subr.bf16.mxu0 0
        %1400 = vmatpush2.bf16.msra.mxu0 0
        %1401 = vmatprep.subr.bf16.mxu0 0
        %1402 = vmatpush2.bf16.msra.mxu0 0
        %1403 = vmatprep.subr.bf16.mxu0 0
        %1404 = vmatpush2.bf16.msra.mxu0 0
        %1405 = vmatprep.mubr.bf16.mxu0 0
        %1406 = vmatmul.mubr.bf16.gmra.mxu0 %v1368
        %v1407 = vpop.f32.mrf.mxu0
        %v1408 = vadd.f32 0.0, %v1407
        %v1409 = vpop.f32.mrf.mxu0
        %v1410 = vpop.f32.mrf.mxu0
        %v1411 = vpop.f32.mrf.mxu0
        %1412 = vdwg.mxu0
        %v1414 = vsel %vm829, %v1318, 0
        %v1417 = vsel %vm1323, %v824, 0
        %1419 = vmatprep.subr.bf16.mxu0 0
        %1420 = vmatpush1.bf16.msra.mxu0 0
        %1421 = vmatprep.subr.bf16.mxu0 0
        %1422 = vmatpush1.bf16.msra.mxu0 0
        %1423 = vmatprep.subr.bf16.mxu0 0
        %1424 = vmatpush1.bf16.msra.mxu0 0
        %1425 = vmatprep.subr.bf16.mxu0 0
        %1426 = vmatpush1.bf16.msra.mxu0 0
        %1427 = vmatprep.subr.bf16.mxu0 0
        %1428 = vmatpush1.bf16.msra.mxu0 0
        %1429 = vmatprep.subr.bf16.mxu0 0
        %1430 = vmatpush1.bf16.msra.mxu0 0
        %1431 = vmatprep.subr.bf16.mxu0 0
        %1432 = vmatpush1.bf16.msra.mxu0 0
        %1433 = vmatprep.subr.bf16.mxu0 0
        %1434 = vmatpush1.bf16.msra.mxu0 %v1417
        %1435 = vmatprep.subr.bf16.mxu0 0
        %1436 = vmatpush2.bf16.msra.mxu0 0
        %1437 = vmatprep.subr.bf16.mxu0 0
        %1438 = vmatpush2.bf16.msra.mxu0 0
        %1439 = vmatprep.subr.bf16.mxu0 0
        %1440 = vmatpush2.bf16.msra.mxu0 0
        %1441 = vmatprep.subr.bf16.mxu0 0
        %1442 = vmatpush2.bf16.msra.mxu0 0
        %1443 = vmatprep.subr.bf16.mxu0 0
        %1444 = vmatpush2.bf16.msra.mxu0 0
        %1445 = vmatprep.subr.bf16.mxu0 0
        %1446 = vmatpush2.bf16.msra.mxu0 0
        %1447 = vmatprep.subr.bf16.mxu0 0
        %1448 = vmatpush2.bf16.msra.mxu0 0
        %1449 = vmatprep.subr.bf16.mxu0 0
        %1450 = vmatpush2.bf16.msra.mxu0 0
        %1451 = vmatprep.mubr.bf16.mxu0 0
        %1452 = vmatmul.mubr.bf16.gmra.mxu0 %v1414
        %v1453 = vpop.f32.mrf.mxu0
        %v1454 = vadd.f32 0.0, %v1453
        %v1455 = vpop.f32.mrf.mxu0
        %v1456 = vpop.f32.mrf.mxu0
        %v1457 = vpop.f32.mrf.mxu0
        %1458 = vdwg.mxu0
        %v1460 = vsel %vm829, %v1319, 0
        %v1463 = vsel %vm1323, %v825, 0
        %1465 = vmatprep.subr.bf16.mxu0 0
        %1466 = vmatpush1.bf16.msra.mxu0 0
        %1467 = vmatprep.subr.bf16.mxu0 0
        %1468 = vmatpush1.bf16.msra.mxu0 0
        %1469 = vmatprep.subr.bf16.mxu0 0
        %1470 = vmatpush1.bf16.msra.mxu0 0
        %1471 = vmatprep.subr.bf16.mxu0 0
        %1472 = vmatpush1.bf16.msra.mxu0 0
        %1473 = vmatprep.subr.bf16.mxu0 0
        %1474 = vmatpush1.bf16.msra.mxu0 0
        %1475 = vmatprep.subr.bf16.mxu0 0
        %1476 = vmatpush1.bf16.msra.mxu0 0
        %1477 = vmatprep.subr.bf16.mxu0 0
        %1478 = vmatpush1.bf16.msra.mxu0 0
        %1479 = vmatprep.subr.bf16.mxu0 0
        %1480 = vmatpush1.bf16.msra.mxu0 %v1463
        %1481 = vmatprep.subr.bf16.mxu0 0
        %1482 = vmatpush2.bf16.msra.mxu0 0
        %1483 = vmatprep.subr.bf16.mxu0 0
        %1484 = vmatpush2.bf16.msra.mxu0 0
        %1485 = vmatprep.subr.bf16.mxu0 0
        %1486 = vmatpush2.bf16.msra.mxu0 0
        %1487 = vmatprep.subr.bf16.mxu0 0
        %1488 = vmatpush2.bf16.msra.mxu0 0
        %1489 = vmatprep.subr.bf16.mxu0 0
        %1490 = vmatpush2.bf16.msra.mxu0 0
        %1491 = vmatprep.subr.bf16.mxu0 0
        %1492 = vmatpush2.bf16.msra.mxu0 0
        %1493 = vmatprep.subr.bf16.mxu0 0
        %1494 = vmatpush2.bf16.msra.mxu0 0
        %1495 = vmatprep.subr.bf16.mxu0 0
        %1496 = vmatpush2.bf16.msra.mxu0 0
        %1497 = vmatprep.mubr.bf16.mxu0 0
        %1498 = vmatmul.mubr.bf16.gmra.mxu0 %v1460
        %v1499 = vpop.f32.mrf.mxu0
        %v1500 = vadd.f32 0.0, %v1499
        %v1501 = vpop.f32.mrf.mxu0
        %v1502 = vpop.f32.mrf.mxu0
        %v1503 = vpop.f32.mrf.mxu0
        %1504 = vdwg.mxu0
        %1506 = vrot.lane.b32.xlu0 %v1408, 8
        %v1507 = vpop.permute.xlu0 %1506
        %1510 = vrot.lane.b32.xlu0 %v1454, 16
        %v1511 = vpop.permute.xlu0 %1510
        %1514 = vrot.lane.b32.xlu0 %v1500, 24
        %v1515 = vpop.permute.xlu0 %1514
        %v1517 = vsel %vm829, %v1362, %v1507
        %vm1518 = vcmask 130048
        %v1519 = vsel %vm1518, %v1517, %v1511
        %vm1520 = vcmask 195584
        %v1521 = vsel %vm1520, %v1519, %v1515
        %v1522 = vld [vmem:[%s628] sm:$0x1]
        %v1523 = vld [vmem:[%s631] sm:$0x1]
        %v1524 = vsel %vm666, %v1521, 0.0
        %1525 = vadd.xlane.f32.xlu0 %v1524
        %v1526 = vpop.xlane.xlu0 %1525
        %v1527 = vmul.f32 %v1526, %v670
        %v1528 = vmul.f32 %v1521, %v1521
        %v1529 = vsel %vm666, %v1528, 0.0
        %1530 = vadd.xlane.f32.xlu0 %v1529
        %v1531 = vpop.xlane.xlu0 %1530
        %v1532 = vmul.f32 %v1531, %v670
        %v1533 = vmul.f32 %v1527, %v1527
        %v1534 = vsub.f32 %v1532, %v1533
        %v1535 = vsub.f32 %v1521, %v1527
        %v1536 = vadd.f32 %v1534, 1e-05
        %v1537 = vrsqrt.pop %v1536
        %v1538 = vmul.f32 %v1535, %v1537
        %v1540 = vlaneseq
        %v1541 = vshrl.u32 %v1540, 7
        %v1542 = vsub.s32 0, %v1541
        %v1543 = vrot.slane %v1522, %v1542
        %v1545 = vmul.f32 %v1538, %v1543
        %v1547 = vlaneseq
        %v1548 = vshrl.u32 %v1547, 7
        %v1549 = vsub.s32 0, %v1548
        %v1550 = vrot.slane %v1523, %v1549
        %v1552 = vadd.f32 %v1545, %v1550
        %s1553 = ssub.f32 1.0, %s662
        %v1554 = vstv %s1553
        %v1555 = vmul.f32 %v1554, %v1552
        %v1556 = vadd.f32 %v663, %v1555
        %v1557 = vld [vmem:[%s634] sm:$0x1]
        %v1558 = vld [vmem:[%s637] sm:$0x1]
        %v1559 = vsel %vm666, %v1556, 0.0
        %1560 = vadd.xlane.f32.xlu0 %v1559
        %v1561 = vpop.xlane.xlu0 %1560
        %v1562 = vmul.f32 %v1561, %v670
        %v1563 = vmul.f32 %v1556, %v1556
        %v1564 = vsel %vm666, %v1563, 0.0
        %1565 = vadd.xlane.f32.xlu0 %v1564
        %v1566 = vpop.xlane.xlu0 %1565
        %v1567 = vmul.f32 %v1566, %v670
        %v1568 = vmul.f32 %v1562, %v1562
        %v1569 = vsub.f32 %v1567, %v1568
        %v1570 = vsub.f32 %v1556, %v1562
        %v1571 = vadd.f32 %v1569, 1e-05
        %v1572 = vrsqrt.pop %v1571
        %v1573 = vmul.f32 %v1570, %v1572
        %v1575 = vlaneseq
        %v1576 = vshrl.u32 %v1575, 7
        %v1577 = vsub.s32 0, %v1576
        %v1578 = vrot.slane %v1557, %v1577
        %v1580 = vmul.f32 %v1573, %v1578
        %v1582 = vlaneseq
        %v1583 = vshrl.u32 %v1582, 7
        %v1584 = vsub.s32 0, %v1583
        %v1585 = vrot.slane %v1558, %v1584
        %v1587 = vadd.f32 %v1580, %v1585
        %v1588 = vpack.c.bf16 %v1587, %v1587
        %v1589 = vld [vmem:[%s642] sm:$0xf]
        %v1590 = vld [vmem:[%s642 + $0x4] sm:$0xf]
        %v1591 = vld [vmem:[%s642 + $0x8] sm:$0xf]
        %v1592 = vld [vmem:[%s642 + $0xc] sm:$0xf]
        %v1593 = vld [vmem:[%s645] sm:$0x1]
        %v1595 = vlaneseq
        %v1596 = vshrl.u32 %v1595, 7
        %v1597 = vsub.s32 0, %v1596
        %v1598 = vrot.slane %v1593, %v1597
        %v1604 = vunpack.c.l.b16 %v1589
        %v1605 = vunpack.c.l.b16 %v1590
        %v1606 = vunpack.c.l.b16 %v1591
        %v1607 = vunpack.c.l.b16 %v1592
        %v1608 = vpack.c.b16 %v1605, %v1604
        %v1609 = vpack.c.b16 %v1607, %v1606
        %v1613 = vsel %vm666, %v1588, 0
        %1615 = vmatprep.subr.bf16.mxu0 0
        %1616 = vmatpush1.bf16.msra.mxu0 0
        %1617 = vmatprep.subr.bf16.mxu0 0
        %1618 = vmatpush1.bf16.msra.mxu0 0
        %1619 = vmatprep.subr.bf16.mxu0 0
        %1620 = vmatpush1.bf16.msra.mxu0 0
        %1621 = vmatprep.subr.bf16.mxu0 0
        %1622 = vmatpush1.bf16.msra.mxu0 0
        %1623 = vmatprep.subr.bf16.mxu0 0
        %1624 = vmatpush1.bf16.msra.mxu0 0
        %1625 = vmatprep.subr.bf16.mxu0 0
        %1626 = vmatpush1.bf16.msra.mxu0 0
        %1627 = vmatprep.subr.bf16.mxu0 0
        %1628 = vmatpush1.bf16.msra.mxu0 %v1609
        %1629 = vmatprep.subr.bf16.mxu0 0
        %1630 = vmatpush1.bf16.msra.mxu0 %v1608
        %1631 = vmatprep.subr.bf16.mxu0 0
        %1632 = vmatpush2.bf16.msra.mxu0 0
        %1633 = vmatprep.subr.bf16.mxu0 0
        %1634 = vmatpush2.bf16.msra.mxu0 0
        %1635 = vmatprep.subr.bf16.mxu0 0
        %1636 = vmatpush2.bf16.msra.mxu0 0
        %1637 = vmatprep.subr.bf16.mxu0 0
        %1638 = vmatpush2.bf16.msra.mxu0 0
        %1639 = vmatprep.subr.bf16.mxu0 0
        %1640 = vmatpush2.bf16.msra.mxu0 0
        %1641 = vmatprep.subr.bf16.mxu0 0
        %1642 = vmatpush2.bf16.msra.mxu0 0
        %1643 = vmatprep.subr.bf16.mxu0 0
        %1644 = vmatpush2.bf16.msra.mxu0 0
        %1645 = vmatprep.subr.bf16.mxu0 0
        %1646 = vmatpush2.bf16.msra.mxu0 0
        %1647 = vmatprep.mubr.bf16.mxu0 0
        %1648 = vmatmul.mubr.bf16.gmra.mxu0 %v1613
        %v1649 = vpop.f32.mrf.mxu0
        %v1650 = vadd.f32 %v1598, %v1649
        %v1651 = vpop.f32.mrf.mxu0
        %v1652 = vpop.f32.mrf.mxu0
        %v1653 = vpop.f32.mrf.mxu0
        %1654 = vdwg.mxu0
        %v1655 = vmax.f32 %v1650, 0.0
        %v1656 = vpack.c.bf16 %v1655, %v1655
        %v1657 = vld [vmem:[%s650] sm:$0xf]
        %v1658 = vld [vmem:[%s650 + $0x4] sm:$0xf]
        %v1659 = vld [vmem:[%s650 + $0x8] sm:$0xf]
        %v1660 = vld [vmem:[%s650 + $0xc] sm:$0xf]
        %v1661 = vld [vmem:[%s650 + $0x10] sm:$0xf]
        %v1662 = vld [vmem:[%s650 + $0x14] sm:$0xf]
        %v1663 = vld [vmem:[%s650 + $0x18] sm:$0xf]
        %v1664 = vld [vmem:[%s650 + $0x1c] sm:$0xf]
        %v1665 = vld [vmem:[%s650 + $0x20] sm:$0xf]
        %v1666 = vld [vmem:[%s650 + $0x24] sm:$0xf]
        %v1667 = vld [vmem:[%s650 + $0x28] sm:$0xf]
        %v1668 = vld [vmem:[%s650 + $0x2c] sm:$0xf]
        %v1669 = vld [vmem:[%s650 + $0x30] sm:$0xf]
        %v1670 = vld [vmem:[%s650 + $0x34] sm:$0xf]
        %v1671 = vld [vmem:[%s650 + $0x38] sm:$0xf]
        %v1672 = vld [vmem:[%s650 + $0x3c] sm:$0xf]
        %v1673 = vld [vmem:[%s653] sm:$0x1]
        %v1675 = vlaneseq
        %v1676 = vshrl.u32 %v1675, 7
        %v1677 = vsub.s32 0, %v1676
        %v1678 = vrot.slane %v1673, %v1677
        %v1696 = vunpack.c.l.b16 %v1657
        %v1697 = vunpack.c.l.b16 %v1658
        %v1698 = vunpack.c.l.b16 %v1659
        %v1699 = vunpack.c.l.b16 %v1660
        %v1700 = vunpack.c.l.b16 %v1661
        %v1701 = vunpack.c.l.b16 %v1662
        %v1702 = vunpack.c.l.b16 %v1663
        %v1703 = vunpack.c.l.b16 %v1664
        %v1704 = vunpack.c.l.b16 %v1665
        %v1705 = vunpack.c.l.b16 %v1666
        %v1706 = vunpack.c.l.b16 %v1667
        %v1707 = vunpack.c.l.b16 %v1668
        %v1708 = vunpack.c.l.b16 %v1669
        %v1709 = vunpack.c.l.b16 %v1670
        %v1710 = vunpack.c.l.b16 %v1671
        %v1711 = vunpack.c.l.b16 %v1672
        %v1712 = vpack.c.b16 %v1697, %v1696
        %v1713 = vpack.c.b16 %v1699, %v1698
        %v1714 = vpack.c.b16 %v1701, %v1700
        %v1715 = vpack.c.b16 %v1703, %v1702
        %v1716 = vpack.c.b16 %v1705, %v1704
        %v1717 = vpack.c.b16 %v1707, %v1706
        %v1718 = vpack.c.b16 %v1709, %v1708
        %v1719 = vpack.c.b16 %v1711, %v1710
        %1728 = vmatprep.subr.bf16.mxu0 0
        %1729 = vmatpush1.bf16.msra.mxu0 %v1719
        %1730 = vmatprep.subr.bf16.mxu0 0
        %1731 = vmatpush1.bf16.msra.mxu0 %v1718
        %1732 = vmatprep.subr.bf16.mxu0 0
        %1733 = vmatpush1.bf16.msra.mxu0 %v1717
        %1734 = vmatprep.subr.bf16.mxu0 0
        %1735 = vmatpush1.bf16.msra.mxu0 %v1716
        %1736 = vmatprep.subr.bf16.mxu0 0
        %1737 = vmatpush1.bf16.msra.mxu0 %v1715
        %1738 = vmatprep.subr.bf16.mxu0 0
        %1739 = vmatpush1.bf16.msra.mxu0 %v1714
        %1740 = vmatprep.subr.bf16.mxu0 0
        %1741 = vmatpush1.bf16.msra.mxu0 %v1713
        %1742 = vmatprep.subr.bf16.mxu0 0
        %1743 = vmatpush1.bf16.msra.mxu0 %v1712
        %1744 = vmatprep.subr.bf16.mxu0 0
        %1745 = vmatpush2.bf16.msra.mxu0 0
        %1746 = vmatprep.subr.bf16.mxu0 0
        %1747 = vmatpush2.bf16.msra.mxu0 0
        %1748 = vmatprep.subr.bf16.mxu0 0
        %1749 = vmatpush2.bf16.msra.mxu0 0
        %1750 = vmatprep.subr.bf16.mxu0 0
        %1751 = vmatpush2.bf16.msra.mxu0 0
        %1752 = vmatprep.subr.bf16.mxu0 0
        %1753 = vmatpush2.bf16.msra.mxu0 0
        %1754 = vmatprep.subr.bf16.mxu0 0
        %1755 = vmatpush2.bf16.msra.mxu0 0
        %1756 = vmatprep.subr.bf16.mxu0 0
        %1757 = vmatpush2.bf16.msra.mxu0 0
        %1758 = vmatprep.subr.bf16.mxu0 0
        %1759 = vmatpush2.bf16.msra.mxu0 0
        %1760 = vmatprep.mubr.bf16.mxu0 0
        %1761 = vmatmul.mubr.bf16.gmra.mxu0 %v1656
        %v1762 = vpop.f32.mrf.mxu0
        %v1763 = vadd.f32 %v1678, %v1762
        %v1764 = vpop.f32.mrf.mxu0
        %v1765 = vpop.f32.mrf.mxu0
        %v1766 = vpop.f32.mrf.mxu0
        %1767 = vdwg.mxu0
        %v1768 = vadd.f32 %v1556, %v1763
        %1769 = vst.msk [vmem:[%s614] sm:$0xff] %vm666, %v1768
        %s1770 = sand.u32 %s384, 1
        %s1771 = scalar_lea.sflag [#allocation4], %s1770
        %s1772 = sand.u32 %s384, 1
        %s1773 = smul.addr %s1772, 8
        %s1774 = scalar_lea.vmem [#allocation7], %s1773
        // Predicated region
        $region85: #{tpu_custom_call.1} parent=71 // pred_check
          %p1775 = pneg %p394
        $region86: #{tpu_custom_call.1} parent=71 // pred_check_branch
          %1777 = sbr.rel (%p1775) target = $region88
        $region87: #{tpu_custom_call.1} parent=71 // pred_region
          %s1779 = ssub.s32 128, 128
          %1780 = vsyncadd %s1771, %s1779
          %s1781 = smul.addr %s35, 128
          %s1782 = scalar_lea.hbm %s13, %s1781
          %s1784 = sshll.u32 %s1774, 4
          %s1785 = int_to_ptr.vmem [resolvable:$true] %s1784
          %1787 = dma.vmem_to_hbm [thread:$0]  %s1785, 128, %s1782, %s1771
        $region88: #{tpu_custom_call.1} parent=71 // pred_fallthru
          _
      $region72: #{tpu_custom_call.1} parent=5 // pred_fallthru
        _
      %p1788 = scmp.le.s32.totalorder 2, %s26
      // Predicated region
      $region89: #{tpu_custom_call.1} parent=5 // pred_check
        %p1789 = pneg %p1788
      $region90: #{tpu_custom_call.1} parent=5 // pred_check_branch
        %1791 = sbr.rel (%p1789) target = $region92
      $region91: #{tpu_custom_call.1} parent=5 // pred_region
        %s1792 = ssub.s32 %s26, 2
        // Predicated region
        $region93: #{tpu_custom_call.1} parent=91 // pred_check
          %p1793 = pneg %p400
        $region94: #{tpu_custom_call.1} parent=91 // pred_check_branch
          %1795 = sbr.rel (%p1793) target = $region96
        $region95: #{tpu_custom_call.1} parent=91 // pred_region
          %s1796 = sand.u32 %s385, 1
          %s1797 = scalar_lea.sflag [#allocation4], %s1796
          %s1798 = sand.u32 %s385, 1
          %s1799 = smul.addr %s1798, 8
          %s1800 = scalar_lea.vmem [#allocation7], %s1799
          %1801 = dma.done %s1797, 128
        $region96: #{tpu_custom_call.1} parent=91 // pred_fallthru
          _
      $region92: #{tpu_custom_call.1} parent=5 // pred_fallthru
        _
    $region6: #{tpu_custom_call.1} parent=1 // loop_footer
      %s30 = sadd.s32 1, %s26
    $region7: #{tpu_custom_call.1} parent=1 // loop_footer_branch
      %25 = sbr.rel target = $region3
    $region8: #{tpu_custom_call.1} parent=1 // loop_exit
      _
    %1802 = vsyncpa [#allocation3], 1
    %s1803 = scalar_lea.sflag [#allocation3], 1
    %1804 = vsyncpa %s1803, 1
    %1805 = vsyncpa [#allocation4], 1
    %s1806 = scalar_lea.sflag [#allocation4], 1
    %1807 = vsyncpa %s1806, 1
    %1808 = vsyncpa [#allocation5], 1
    %s1809 = scalar_lea.sflag [#allocation5], 1
    %1810 = vsyncpa %s1809, 1

</llo_original>
